<compile_context>
chip_gen: v6e
topology: v6e:2x2x1
jax: 0.10.0
libtpu: 0.0.40
codegen_flags: <defaults>
</compile_context>

<pallas_src>
import math

import jax
import jax.numpy as jnp
from jax.experimental import pallas as pl
from jax.experimental.pallas import tpu as pltpu


# --------------------------------------------------------------------------
# Host-side weight preprocessing
# --------------------------------------------------------------------------
def _fold_bn(w, bn, eps=1e-5):
    """Fold BatchNorm (eval mode) into conv weight/bias."""
    s = bn["gamma"] / jnp.sqrt(bn["var"] + eps)
    return w * s[:, None, None, None], bn["beta"] - bn["mean"] * s


def _upsample_matrix(n):
    """(2n, n) matrix U with U @ v == bilinear 2x upsample (align_corners=False)."""
    u = jnp.arange(2 * n)
    k = u // 2
    nb = jnp.where(u % 2 == 0, jnp.maximum(k - 1, 0), jnp.minimum(k + 1, n - 1))
    cols = jnp.arange(n)[None, :]
    main = (cols == k[:, None]).astype(jnp.float32)
    side = (cols == nb[:, None]).astype(jnp.float32)
    return 0.75 * main + 0.25 * side


def _conv_band_matrices(w, width):
    """Fold the 3x3 conv's kw taps and W-axis zero padding into 3 band matrices.

    w: folded conv weight (Cout, Cin, 3, 3).
    Returns K of shape (3, width*Cin, width*Cout) with
      K[kh, wi*Cin + c, v*Cout + o] = w[o, c, kh, wi - v + 1]   (0 outside band)
    so that  y[u] = sum_kh  x_padH[u + kh] @ K[kh]   implements the conv.
    """
    cout, cin = w.shape[0], w.shape[1]
    wi = jnp.arange(width)[:, None]
    vi = jnp.arange(width)[None, :]
    ks = []
    for kh in range(3):
        k = jnp.zeros((width, cin, width, cout), jnp.float32)
        for kw in range(3):
            sel = (wi == vi + (kw - 1)).astype(jnp.float32)          # (width, width)
            k = k + sel[:, None, :, None] * w[:, :, kh, kw].T[None, :, None, :]
        ks.append(k.reshape(width * cin, width * cout))
    return jnp.stack(ks, axis=0)


# --------------------------------------------------------------------------
# Fused kernel: one grid step == one image (upsample + conv1 + conv2 in VMEM)
# --------------------------------------------------------------------------
def _fused_fcn_kernel(x_ref, ah_ref, bw_ref, k1_ref, b1_ref, k2_ref, b2_ref,
                      o_ref, pad1_ref, pad2_ref):
    cdt = k1_ref.dtype                       # MXU operand dtype (f32 or bf16)
    h2 = ah_ref.shape[0]                     # output height (2H)

    # ---- bilinear 2x upsample (align_corners=False) as two MXU matmuls ----
    x = x_ref[0].astype(cdt)                                            # (H, W*Cin)
    t = jnp.dot(ah_ref[...], x, preferred_element_type=jnp.float32)     # (2H, W*Cin)
    up = jnp.dot(t.astype(cdt), bw_ref[...],
                 preferred_element_type=jnp.float32)                    # (2H, 2W*Cin)

    # ---- 3x3 conv (+ folded BN bias) + ReLU, halo handled in VMEM scratch ----
    def conv3x3_relu(src, pad_ref, k_ref, b_ref):
        nlanes = pad_ref.shape[1]
        zero_row = jnp.zeros((1, nlanes), jnp.float32)
        pad_ref[0:1, :] = zero_row                    # top halo row
        pad_ref[h2 + 1:h2 + 2, :] = zero_row          # bottom halo row
        pad_ref[1:h2 + 1, :] = src                    # interior
        acc = jnp.dot(pad_ref[0:h2, :].astype(cdt), k_ref[0],
                      preferred_element_type=jnp.float32)
        acc = acc + jnp.dot(pad_ref[1:h2 + 1, :].astype(cdt), k_ref[1],
                            preferred_element_type=jnp.float32)
        acc = acc + jnp.dot(pad_ref[2:h2 + 2, :].astype(cdt), k_ref[2],
                            preferred_element_type=jnp.float32)
        return jnp.maximum(acc + b_ref[...], 0.0)     # f32 epilogue

    y1 = conv3x3_relu(up, pad1_ref, k1_ref, b1_ref)   # (2H, 2W*Cmid)
    y2 = conv3x3_relu(y1, pad2_ref, k2_ref, b2_ref)   # (2H, 2W*Cout)
    o_ref[0] = y2.astype(o_ref.dtype)


# --------------------------------------------------------------------------
# Forward wrapper (NCHW in / NCHW out, like the PyTorch module)
# --------------------------------------------------------------------------
def fusion_model_v4_fcn_forward(params, x_nchw, res=None, *,
                                compute_dtype=jnp.float32):
    del res   # the original forward() takes `res` but never uses it
    n, c_in, h, w = x_nchw.shape
    ho, wo = 2 * h, 2 * w

    w1, b1 = _fold_bn(params["pre_conv"]["w"], params["pre_conv"]["bn"])
    w2, b2 = _fold_bn(params["pre_conv2"]["w"], params["pre_conv2"]["bn"])
    c_mid, c_out = w1.shape[0], w2.shape[0]

    # Per-call constants (weight preprocessing).
    a_h = _upsample_matrix(h)                                                # (2H, H)
    b_w = jnp.kron(_upsample_matrix(w).T, jnp.eye(c_in, dtype=jnp.float32))  # (W*Cin, 2W*Cin)
    k1 = _conv_band_matrices(w1, wo)                                         # (3, 2W*Cin, 2W*Cmid)
    k2 = _conv_band_matrices(w2, wo)                                         # (3, 2W*Cmid, 2W*Cout)
    b1_row = jnp.tile(b1, (wo,)).reshape(1, wo * c_mid)
    b2_row = jnp.tile(b2, (wo,)).reshape(1, wo * c_out)

    cdt = compute_dtype
    a_h, b_w, k1, k2 = (a_h.astype(cdt), b_w.astype(cdt),
                        k1.astype(cdt), k2.astype(cdt))

    # NCHW -> lane-dense per-row layout (N, H, W*Cin); the reshape is free.
    x_rows = jnp.transpose(x_nchw, (0, 2, 3, 1)).reshape(n, h, w * c_in)

    out_rows = pl.pallas_call(
        _fused_fcn_kernel,
        out_shape=jax.ShapeDtypeStruct((n, ho, wo * c_out), jnp.float32),
        grid=(n,),
        in_specs=[
            pl.BlockSpec((1, h, w * c_in), lambda i: (i, 0, 0)),
            pl.BlockSpec((ho, h), lambda i: (0, 0)),
            pl.BlockSpec((w * c_in, wo * c_in), lambda i: (0, 0)),
            pl.BlockSpec((3, wo * c_in, wo * c_mid), lambda i: (0, 0, 0)),
            pl.BlockSpec((1, wo * c_mid), lambda i: (0, 0)),
            pl.BlockSpec((3, wo * c_mid, wo * c_out), lambda i: (0, 0, 0)),
            pl.BlockSpec((1, wo * c_out), lambda i: (0, 0)),
        ],
        out_specs=pl.BlockSpec((1, ho, wo * c_out), lambda i: (i, 0, 0)),
        scratch_shapes=[
            pltpu.VMEM((ho + 2, wo * c_in), jnp.float32),    # H-padded upsample
            pltpu.VMEM((ho + 2, wo * c_mid), jnp.float32),   # H-padded conv1 out
        ],
        compiler_params=pltpu.CompilerParams(
            dimension_semantics=("parallel",),
            vmem_limit_bytes=32 * 1024 * 1024,
        ),
    )(x_rows, a_h, b_w, k1, b1_row, k2, b2_row)

    # (N, 2H, 2W*Cout) -> NCHW to match the PyTorch module's output layout.
    return jnp.transpose(out_rows.reshape(n, ho, wo, c_out), (0, 3, 1, 2))


# --------------------------------------------------------------------------
# Pure-JAX reference (exact PyTorch semantics) for the correctness check
# --------------------------------------------------------------------------
def _upsample2x_bilinear_ref(x):
    """F.interpolate(x, scale_factor=2, mode='bilinear', align_corners=False)."""
    _, _, h, w = x.shape

    def coords(length):
        j = jnp.arange(2 * length)
        src = jnp.maximum((j + 0.5) / 2.0 - 0.5, 0.0)
        lo = jnp.floor(src).astype(jnp.int32)
        hi = jnp.minimum(lo + 1, length - 1)
        return lo, hi, src - lo

    lo_h, hi_h, fh = coords(h)
    lo_w, hi_w, fw = coords(w)
    t = (x[:, :, lo_h, :] * (1.0 - fh)[None, None, :, None]
         + x[:, :, hi_h, :] * fh[None, None, :, None])
    return t[:, :, :, lo_w] * (1.0 - fw) + t[:, :, :, hi_w] * fw


def _conv_bn_relu_ref(x, layer, eps=1e-5):
    y = jax.lax.conv_general_dilated(
        x, layer["w"], (1, 1), ((1, 1), (1, 1)),
        dimension_numbers=("NCHW", "OIHW", "NCHW"))
    bn = layer["bn"]
    s = bn["gamma"] / jnp.sqrt(bn["var"] + eps)
    y = y * s[None, :, None, None] + (bn["beta"] - bn["mean"] * s)[None, :, None, None]
    return jnp.maximum(y, 0.0)


def fusion_model_v4_fcn_ref(params, x_nchw, res=None):
    del res
    y = _upsample2x_bilinear_ref(x_nchw)
    y = _conv_bn_relu_ref(y, params["pre_conv"])
    return _conv_bn_relu_ref(y, params["pre_conv2"])


# --------------------------------------------------------------------------
# Deterministic parameter / input construction and self-check
# --------------------------------------------------------------------------
def _init_convbn(key, cin, cout):
    ka, kb, kc, kd, ke = jax.random.split(key, 5)
    w = jax.random.normal(ka, (cout, cin, 3, 3), jnp.float32) / math.sqrt(cin * 9)
    bn = {
        "gamma": 1.0 + 0.1 * jax.random.normal(kb, (cout,), jnp.float32),
        "beta": 0.1 * jax.random.normal(kc, (cout,), jnp.float32),
        "mean": 0.1 * jax.random.normal(kd, (cout,), jnp.float32),
        "var": 0.5 + jax.random.uniform(ke, (cout,), jnp.float32),
    }
    return {"w": w, "bn": bn}


if __name__ == "__main__":
    N, H, W = 2, 16, 16
    ENCODE_CHAN, DEC_IN, DEC_OUT = 8, 4, 8

    key = jax.random.PRNGKey(0)
    kx, kr, kc1, kc2 = jax.random.split(key, 4)
    x = jax.random.normal(kx, (N, DEC_IN, H, W), jnp.float32)
    # `res` is part of the torch forward() signature but unused by the module.
    res = jax.random.normal(kr, (N, ENCODE_CHAN, 2 * H, 2 * W), jnp.float32)

    params = {
        "pre_conv": _init_convbn(kc1, DEC_IN, DEC_IN),
        "pre_conv2": _init_convbn(kc2, DEC_IN, DEC_OUT),
    }

    # f32 MXU path
    out = jax.block_until_ready(fusion_model_v4_fcn_forward(params, x, res))
    ref = fusion_model_v4_fcn_ref(params, x, res)
    assert out.shape == ref.shape == (N, DEC_OUT, 2 * H, 2 * W)
    err = float(jnp.max(jnp.abs(out - ref)))
    assert err < 2e-3, f"f32 path: max abs error too large: {err}"

    # bf16 MXU-operand path (f32 accumulation + f32 epilogue), looser tolerance.
    out_bf16 = jax.block_until_ready(
        fusion_model_v4_fcn_forward(params, x, res, compute_dtype=jnp.bfloat16))
    scale = float(jnp.max(jnp.abs(ref))) + 1.0
    err_bf = float(jnp.max(jnp.abs(out_bf16 - ref)))
    assert err_bf < 0.1 * scale, f"bf16 path: max abs error too large: {err_bf}"

    print("KERNEL_OK")
</pallas_src>

<mosaic_0001>
module attributes {stable_mosaic.version = 11 : i64} {
  func.func @_fused_fcn_kernel(%arg0: i32, %arg1: memref<1x16x64xf32, #tpu.memory_space<vmem>>, %arg2: memref<32x16xf32, #tpu.memory_space<vmem>>, %arg3: memref<64x128xf32, #tpu.memory_space<vmem>>, %arg4: memref<3x128x128xf32, #tpu.memory_space<vmem>>, %arg5: memref<1x128xf32, #tpu.memory_space<vmem>>, %arg6: memref<3x128x256xf32, #tpu.memory_space<vmem>>, %arg7: memref<1x256xf32, #tpu.memory_space<vmem>>, %arg8: memref<1x32x256xf32, #tpu.memory_space<vmem>>, %arg9: memref<34x128xf32, #tpu.memory_space<vmem>>, %arg10: memref<34x128xf32, #tpu.memory_space<vmem>>) attributes {dimension_semantics = [#tpu.dimension_semantics<parallel>], iteration_bounds = array<i64: 2>, scalar_prefetch = 0 : i64, scratch_operands = 2 : i64, tpu.core_type = #tpu.core_type<tc>, window_params = [{transform_indices = @transform_0, window_bounds = array<i64: 1, 16, 64>}, {pipeline_mode = #tpu.pipeline_mode<synchronous>, transform_indices = @transform_1, window_bounds = array<i64: 32, 16>}, {pipeline_mode = #tpu.pipeline_mode<synchronous>, transform_indices = @transform_2, window_bounds = array<i64: 64, 128>}, {pipeline_mode = #tpu.pipeline_mode<synchronous>, transform_indices = @transform_3, window_bounds = array<i64: 3, 128, 128>}, {pipeline_mode = #tpu.pipeline_mode<synchronous>, transform_indices = @transform_4, window_bounds = array<i64: 1, 128>}, {pipeline_mode = #tpu.pipeline_mode<synchronous>, transform_indices = @transform_5, window_bounds = array<i64: 3, 128, 256>}, {pipeline_mode = #tpu.pipeline_mode<synchronous>, transform_indices = @transform_6, window_bounds = array<i64: 1, 256>}, {transform_indices = @transform_7, window_bounds = array<i64: 1, 32, 256>}]} {
    %c0 = arith.constant 0 : index
    %c0_0 = arith.constant 0 : index
    %c0_1 = arith.constant 0 : index
    %0 = vector.load %arg1[%c0, %c0_0, %c0_1] : memref<1x16x64xf32, #tpu.memory_space<vmem>>, vector<1x16x64xf32>
    %1 = vector.shape_cast %0 : vector<1x16x64xf32> to vector<16x64xf32>
    %c0_2 = arith.constant 0 : index
    %c0_3 = arith.constant 0 : index
    %2 = vector.load %arg2[%c0_2, %c0_3] : memref<32x16xf32, #tpu.memory_space<vmem>>, vector<32x16xf32>
    %cst = arith.constant dense<0.000000e+00> : vector<32x64xf32>
    %3 = tpu.matmul %2, %1, %cst {dimension_numbers = #tpu.dot_dimension_numbers<[1], [0], [0], [1], [0, 0, 1, 1], [], []>} : vector<32x16xf32>, vector<16x64xf32>, vector<32x64xf32> -> vector<32x64xf32>
    %c0_4 = arith.constant 0 : index
    %c0_5 = arith.constant 0 : index
    %4 = vector.load %arg3[%c0_4, %c0_5] : memref<64x128xf32, #tpu.memory_space<vmem>>, vector<64x128xf32>
    %cst_6 = arith.constant dense<0.000000e+00> : vector<32x128xf32>
    %5 = tpu.matmul %3, %4, %cst_6 {dimension_numbers = #tpu.dot_dimension_numbers<[1], [0], [0], [1], [0, 0, 1, 1], [], []>} : vector<32x64xf32>, vector<64x128xf32>, vector<32x128xf32> -> vector<32x128xf32>
    %cst_7 = arith.constant 0.000000e+00 : f32
    %6 = vector.broadcast %cst_7 : f32 to vector<1x128xf32>
    %c0_8 = arith.constant 0 : index
    %c0_9 = arith.constant 0 : index
    %7 = vector.load %arg9[%c0_8, %c0_9] : memref<34x128xf32, #tpu.memory_space<vmem>>, vector<1x128xf32>
    tpu.vector_store %arg9[%c0_8, %c0_9], %6 {strides = array<i32>} : memref<34x128xf32, #tpu.memory_space<vmem>>, vector<1x128xf32>,
    %c33 = arith.constant 33 : index
    %c0_10 = arith.constant 0 : index
    %8 = vector.load %arg9[%c33, %c0_10] : memref<34x128xf32, #tpu.memory_space<vmem>>, vector<1x128xf32>
    tpu.vector_store %arg9[%c33, %c0_10], %6 {strides = array<i32>} : memref<34x128xf32, #tpu.memory_space<vmem>>, vector<1x128xf32>,
    %c1 = arith.constant 1 : index
    %c0_11 = arith.constant 0 : index
    %9 = vector.load %arg9[%c1, %c0_11] : memref<34x128xf32, #tpu.memory_space<vmem>>, vector<32x128xf32>
    tpu.vector_store %arg9[%c1, %c0_11], %5 {strides = array<i32>} : memref<34x128xf32, #tpu.memory_space<vmem>>, vector<32x128xf32>,
    %c0_12 = arith.constant 0 : index
    %c0_13 = arith.constant 0 : index
    %10 = vector.load %arg9[%c0_12, %c0_13] : memref<34x128xf32, #tpu.memory_space<vmem>>, vector<32x128xf32>
    %c0_14 = arith.constant 0 : index
    %c0_15 = arith.constant 0 : index
    %c0_16 = arith.constant 0 : index
    %11 = vector.load %arg4[%c0_14, %c0_15, %c0_16] : memref<3x128x128xf32, #tpu.memory_space<vmem>>, vector<1x128x128xf32>
    %12 = vector.shape_cast %11 : vector<1x128x128xf32> to vector<128x128xf32>
    %cst_17 = arith.constant dense<0.000000e+00> : vector<32x128xf32>
    %13 = tpu.matmul %10, %12, %cst_17 {dimension_numbers = #tpu.dot_dimension_numbers<[1], [0], [0], [1], [0, 0, 1, 1], [], []>} : vector<32x128xf32>, vector<128x128xf32>, vector<32x128xf32> -> vector<32x128xf32>
    %c1_18 = arith.constant 1 : index
    %c0_19 = arith.constant 0 : index
    %14 = vector.load %arg9[%c1_18, %c0_19] : memref<34x128xf32, #tpu.memory_space<vmem>>, vector<32x128xf32>
    %c1_20 = arith.constant 1 : index
    %c0_21 = arith.constant 0 : index
    %c0_22 = arith.constant 0 : index
    %15 = vector.load %arg4[%c1_20, %c0_21, %c0_22] : memref<3x128x128xf32, #tpu.memory_space<vmem>>, vector<1x128x128xf32>
    %16 = vector.shape_cast %15 : vector<1x128x128xf32> to vector<128x128xf32>
    %cst_23 = arith.constant dense<0.000000e+00> : vector<32x128xf32>
    %17 = tpu.matmul %14, %16, %cst_23 {dimension_numbers = #tpu.dot_dimension_numbers<[1], [0], [0], [1], [0, 0, 1, 1], [], []>} : vector<32x128xf32>, vector<128x128xf32>, vector<32x128xf32> -> vector<32x128xf32>
    %18 = arith.addf %13, %17 : vector<32x128xf32>
    %c2 = arith.constant 2 : index
    %c0_24 = arith.constant 0 : index
    %19 = vector.load %arg9[%c2, %c0_24] : memref<34x128xf32, #tpu.memory_space<vmem>>, vector<32x128xf32>
    %c2_25 = arith.constant 2 : index
    %c0_26 = arith.constant 0 : index
    %c0_27 = arith.constant 0 : index
    %20 = vector.load %arg4[%c2_25, %c0_26, %c0_27] : memref<3x128x128xf32, #tpu.memory_space<vmem>>, vector<1x128x128xf32>
    %21 = vector.shape_cast %20 : vector<1x128x128xf32> to vector<128x128xf32>
    %cst_28 = arith.constant dense<0.000000e+00> : vector<32x128xf32>
    %22 = tpu.matmul %19, %21, %cst_28 {dimension_numbers = #tpu.dot_dimension_numbers<[1], [0], [0], [1], [0, 0, 1, 1], [], []>} : vector<32x128xf32>, vector<128x128xf32>, vector<32x128xf32> -> vector<32x128xf32>
    %23 = arith.addf %18, %22 : vector<32x128xf32>
    %c0_29 = arith.constant 0 : index
    %c0_30 = arith.constant 0 : index
    %24 = vector.load %arg5[%c0_29, %c0_30] : memref<1x128xf32, #tpu.memory_space<vmem>>, vector<1x128xf32>
    %25 = vector.broadcast %24 : vector<1x128xf32> to vector<32x128xf32>
    %26 = arith.addf %23, %25 : vector<32x128xf32>
    %cst_31 = arith.constant 0.000000e+00 : f32
    %27 = vector.broadcast %cst_31 : f32 to vector<32x128xf32>
    %28 = arith.maximumf %26, %27 : vector<32x128xf32>
    %cst_32 = arith.constant 0.000000e+00 : f32
    %29 = vector.broadcast %cst_32 : f32 to vector<1x128xf32>
    %c0_33 = arith.constant 0 : index
    %c0_34 = arith.constant 0 : index
    %30 = vector.load %arg10[%c0_33, %c0_34] : memref<34x128xf32, #tpu.memory_space<vmem>>, vector<1x128xf32>
    tpu.vector_store %arg10[%c0_33, %c0_34], %29 {strides = array<i32>} : memref<34x128xf32, #tpu.memory_space<vmem>>, vector<1x128xf32>,
    %c33_35 = arith.constant 33 : index
    %c0_36 = arith.constant 0 : index
    %31 = vector.load %arg10[%c33_35, %c0_36] : memref<34x128xf32, #tpu.memory_space<vmem>>, vector<1x128xf32>
    tpu.vector_store %arg10[%c33_35, %c0_36], %29 {strides = array<i32>} : memref<34x128xf32, #tpu.memory_space<vmem>>, vector<1x128xf32>,
    %c1_37 = arith.constant 1 : index
    %c0_38 = arith.constant 0 : index
    %32 = vector.load %arg10[%c1_37, %c0_38] : memref<34x128xf32, #tpu.memory_space<vmem>>, vector<32x128xf32>
    tpu.vector_store %arg10[%c1_37, %c0_38], %28 {strides = array<i32>} : memref<34x128xf32, #tpu.memory_space<vmem>>, vector<32x128xf32>,
    %c0_39 = arith.constant 0 : index
    %c0_40 = arith.constant 0 : index
    %33 = vector.load %arg10[%c0_39, %c0_40] : memref<34x128xf32, #tpu.memory_space<vmem>>, vector<32x128xf32>
    %c0_41 = arith.constant 0 : index
    %c0_42 = arith.constant 0 : index
    %c0_43 = arith.constant 0 : index
    %34 = vector.load %arg6[%c0_41, %c0_42, %c0_43] : memref<3x128x256xf32, #tpu.memory_space<vmem>>, vector<1x128x256xf32>
    %35 = vector.shape_cast %34 : vector<1x128x256xf32> to vector<128x256xf32>
    %cst_44 = arith.constant dense<0.000000e+00> : vector<32x256xf32>
    %36 = tpu.matmul %33, %35, %cst_44 {dimension_numbers = #tpu.dot_dimension_numbers<[1], [0], [0], [1], [0, 0, 1, 1], [], []>} : vector<32x128xf32>, vector<128x256xf32>, vector<32x256xf32> -> vector<32x256xf32>
    %c1_45 = arith.constant 1 : index
    %c0_46 = arith.constant 0 : index
    %37 = vector.load %arg10[%c1_45, %c0_46] : memref<34x128xf32, #tpu.memory_space<vmem>>, vector<32x128xf32>
    %c1_47 = arith.constant 1 : index
    %c0_48 = arith.constant 0 : index
    %c0_49 = arith.constant 0 : index
    %38 = vector.load %arg6[%c1_47, %c0_48, %c0_49] : memref<3x128x256xf32, #tpu.memory_space<vmem>>, vector<1x128x256xf32>
    %39 = vector.shape_cast %38 : vector<1x128x256xf32> to vector<128x256xf32>
    %cst_50 = arith.constant dense<0.000000e+00> : vector<32x256xf32>
    %40 = tpu.matmul %37, %39, %cst_50 {dimension_numbers = #tpu.dot_dimension_numbers<[1], [0], [0], [1], [0, 0, 1, 1], [], []>} : vector<32x128xf32>, vector<128x256xf32>, vector<32x256xf32> -> vector<32x256xf32>
    %41 = arith.addf %36, %40 : vector<32x256xf32>
    %c2_51 = arith.constant 2 : index
    %c0_52 = arith.constant 0 : index
    %42 = vector.load %arg10[%c2_51, %c0_52] : memref<34x128xf32, #tpu.memory_space<vmem>>, vector<32x128xf32>
    %c2_53 = arith.constant 2 : index
    %c0_54 = arith.constant 0 : index
    %c0_55 = arith.constant 0 : index
    %43 = vector.load %arg6[%c2_53, %c0_54, %c0_55] : memref<3x128x256xf32, #tpu.memory_space<vmem>>, vector<1x128x256xf32>
    %44 = vector.shape_cast %43 : vector<1x128x256xf32> to vector<128x256xf32>
    %cst_56 = arith.constant dense<0.000000e+00> : vector<32x256xf32>
    %45 = tpu.matmul %42, %44, %cst_56 {dimension_numbers = #tpu.dot_dimension_numbers<[1], [0], [0], [1], [0, 0, 1, 1], [], []>} : vector<32x128xf32>, vector<128x256xf32>, vector<32x256xf32> -> vector<32x256xf32>
    %46 = arith.addf %41, %45 : vector<32x256xf32>
    %c0_57 = arith.constant 0 : index
    %c0_58 = arith.constant 0 : index
    %47 = vector.load %arg7[%c0_57, %c0_58] : memref<1x256xf32, #tpu.memory_space<vmem>>, vector<1x256xf32>
    %48 = vector.broadcast %47 : vector<1x256xf32> to vector<32x256xf32>
    %49 = arith.addf %46, %48 : vector<32x256xf32>
    %cst_59 = arith.constant 0.000000e+00 : f32
    %50 = vector.broadcast %cst_59 : f32 to vector<32x256xf32>
    %51 = arith.maximumf %49, %50 : vector<32x256xf32>
    %c0_60 = arith.constant 0 : index
    %c0_61 = arith.constant 0 : index
    %c0_62 = arith.constant 0 : index
    %52 = vector.load %arg8[%c0_60, %c0_61, %c0_62] : memref<1x32x256xf32, #tpu.memory_space<vmem>>, vector<1x32x256xf32>
    %53 = vector.shape_cast %52 : vector<1x32x256xf32> to vector<32x256xf32>
    %54 = vector.shape_cast %51 : vector<32x256xf32> to vector<1x32x256xf32>
    tpu.vector_store %arg8[%c0_60, %c0_61, %c0_62], %54 {strides = array<i32>} : memref<1x32x256xf32, #tpu.memory_space<vmem>>, vector<1x32x256xf32>,
    return
  }
  func.func @transform_0(%arg0: i32) -> (i32, i32, i32) {
    %c0_i32 = arith.constant 0 : i32
    %c0_i32_0 = arith.constant 0 : i32
    %c0_i32_1 = arith.constant 0 : i32
    return %arg0, %c0_i32, %c0_i32_0 : i32, i32, i32
  }
  func.func @transform_1(%arg0: i32) -> (i32, i32) {
    %c0_i32 = arith.constant 0 : i32
    %c0_i32_0 = arith.constant 0 : i32
    %c0_i32_1 = arith.constant 0 : i32
    return %c0_i32, %c0_i32_0 : i32, i32
  }
  func.func @transform_2(%arg0: i32) -> (i32, i32) {
    %c0_i32 = arith.constant 0 : i32
    %c0_i32_0 = arith.constant 0 : i32
    %c0_i32_1 = arith.constant 0 : i32
    return %c0_i32, %c0_i32_0 : i32, i32
  }
  func.func @transform_3(%arg0: i32) -> (i32, i32, i32) {
    %c0_i32 = arith.constant 0 : i32
    %c0_i32_0 = arith.constant 0 : i32
    %c0_i32_1 = arith.constant 0 : i32
    %c0_i32_2 = arith.constant 0 : i32
    return %c0_i32, %c0_i32_0, %c0_i32_1 : i32, i32, i32
  }
  func.func @transform_4(%arg0: i32) -> (i32, i32) {
    %c0_i32 = arith.constant 0 : i32
    %c0_i32_0 = arith.constant 0 : i32
    %c0_i32_1 = arith.constant 0 : i32
    return %c0_i32, %c0_i32_0 : i32, i32
  }
  func.func @transform_5(%arg0: i32) -> (i32, i32, i32) {
    %c0_i32 = arith.constant 0 : i32
    %c0_i32_0 = arith.constant 0 : i32
    %c0_i32_1 = arith.constant 0 : i32
    %c0_i32_2 = arith.constant 0 : i32
    return %c0_i32, %c0_i32_0, %c0_i32_1 : i32, i32, i32
  }
  func.func @transform_6(%arg0: i32) -> (i32, i32) {
    %c0_i32 = arith.constant 0 : i32
    %c0_i32_0 = arith.constant 0 : i32
    %c0_i32_1 = arith.constant 0 : i32
    return %c0_i32, %c0_i32_0 : i32, i32
  }
  func.func @transform_7(%arg0: i32) -> (i32, i32, i32) {
    %c0_i32 = arith.constant 0 : i32
    %c0_i32_0 = arith.constant 0 : i32
    %c0_i32_1 = arith.constant 0 : i32
    return %arg0, %c0_i32, %c0_i32_0 : i32, i32, i32
  }
}

</mosaic_0001>

<llo_original>
// kernel: tpu_custom_call.1
$region0: #{tpu_custom_call.1}
  #allocation0 [shape = 'u32[]', space=smem, size = 0x4, offset = 0x4, fixed_abs, tag = 'smem constant byte address 0x4 - core index']
  #allocation1 [shape = 'u32[144,128]{1,0:T(1,128)}', space=vmem, size = 0x12000, scoped, tag = 'internal scratch']
  #allocation2 [shape = 'f32[34,128]{1,0:T(8,128)}', space=vmem, size = 0x5000, scoped, tag = 'scratch operand']
  #allocation3 [shape = 'f32[34,128]{1,0:T(8,128)}', space=vmem, size = 0x5000, scoped, tag = 'scratch operand']
  %s0 = inlined_call_operand.vmem [shape: f32[2,16,64], index: 0, kind: input, shape index: {}]
  %s1 = inlined_call_operand.vmem [shape: f32[32,16], index: 1, kind: input, shape index: {}]
  %s2 = inlined_call_operand.hbm [shape: f32[64,128], index: 2, kind: input, shape index: {}]
  %s3 = inlined_call_operand.hbm [shape: f32[3,128,128], index: 3, kind: input, shape index: {}]
  %s4 = inlined_call_operand.vmem [shape: f32[1,128], index: 4, kind: input, shape index: {}]
  %s5 = inlined_call_operand.hbm [shape: f32[3,128,256], index: 5, kind: input, shape index: {}]
  %s6 = inlined_call_operand.vmem [shape: f32[1,256], index: 6, kind: input, shape index: {}]
  %s7 = inlined_call_operand.hbm [shape: f32[2,32,256], index: 7, kind: output, shape index: {}]
  %s8 = sld [smem:[#allocation0]]
  $region73: #{tpu_custom_call.1} parent=0
    _
  %s10 = ssub.s32 1, %s8
  %s11 = scalar_select 0, %s10, %s8
  $region1: #{tpu_custom_call.1} parent=0
    #allocation4 [shape = 'u8[32768]{0}', space=vmem, size = 0x8000, scoped, tag = 'input window, operand 2, single buffered']
    #allocation5 [shape = 's32[2]{0}', space=sflag, size = 0x8, scoped, tag = 'scoped memory for tpu_custom_call.1']
    #allocation6 [shape = 's32[2]{0}', space=sflag, size = 0x8, scoped, tag = 'scoped memory for tpu_custom_call.1']
    #allocation7 [shape = 'u8[196608]{0}', space=vmem, size = 0x30000, scoped, tag = 'input window, operand 3, single buffered']
    #allocation8 [shape = 's32[1]{0}', space=sflag, size = 0x4, scoped, tag = 'scoped memory for tpu_custom_call.1']
    #allocation9 [shape = 'u8[393216]{0}', space=vmem, size = 0x60000, scoped, tag = 'input window, operand 5, single buffered']
    #allocation10 [shape = 'u8[65536]{0}', space=vmem, size = 0x10000, scoped, tag = 'output window, operand 0']
    %12 = vsyncpa [#allocation5], 0
    %13 = vsyncpa [#allocation8], 0
    %14 = vsyncpa [#allocation6], 0
    %s15 = scalar_lea.sflag [#allocation6], 1
    %16 = vsyncpa %s15, 0
    loop: start=0, step=1, limit=4
    $region2: #{tpu_custom_call.1} parent=1 // loop_pre_header
      _
    $region3: #{tpu_custom_call.1} parent=1 // loop_header
      %s18 = sphi 0, %s22
      %p19 = scmp.ge.s32.totalorder %s18, 4
      %s28 = sphi 0, %s30
      %s31 = sphi 0, %s28
      %s32 = sphi 0, %s31
      %s48 = sphi 0, %s32
      %s52 = sphi 0, %s52
      %s54 = sphi 0, %s52
      %s55 = sphi 0, %s54
      %s69 = sphi 0, %s55
      %s73 = sphi 0, %s73
      %s75 = sphi 0, %s73
      %s76 = sphi 0, %s75
      %s90 = sphi 0, %s76
      %s94 = sphi 0, %s94
      %s96 = sphi 0, %s94
      %s97 = sphi 0, %s96
      %s111 = sphi 0, %s97
      %s115 = sphi 0, %s115
      %s117 = sphi 0, %s115
      %s118 = sphi 0, %s117
      %s132 = sphi 0, %s118
      %s136 = sphi 0, %s136
      %s138 = sphi 0, %s136
      %s139 = sphi 0, %s138
      %s153 = sphi 0, %s139
      %s157 = sphi 0, %s157
      %s159 = sphi 0, %s157
      %s160 = sphi 0, %s159
      %s174 = sphi 0, %s160
      %s180 = sphi 0, %s182
      %s183 = sphi 0, %s180
      %s184 = sphi 0, %s183
      %s200 = sphi 0, %s184
    $region4: #{tpu_custom_call.1} parent=1 // loop_header_branch
      %21 = sbr.rel (%p19) target = $region8
    $region5: #{tpu_custom_call.1} parent=1 // loop_body
      %s23 = ssub.s32 %s18, 1
      %s24 = ssub.s32 %s18, 2
      %s25 = sadd.s32 %s18, 1
      %s26 = ssub.s32 %s18, %s25
      %p27 = scmp.eq.s32.totalorder %s26, 0
      %s29 = sadd.s32 %s28, 1
      %s30 = scalar_select %p27, %s28, %s29
      %p33 = pneg %p27
      %p34 = scmp.eq.s32.totalorder %s18, 1
      %p35 = por %p33, %p34
      %p36 = scmp.ne.s32.totalorder %s28, %s31
      %p37 = scmp.eq.s32.totalorder %s18, 0
      %p38 = por %p36, %p37
      %p39 = scmp.ne.s32.totalorder %s28, %s31
      %p40 = scmp.eq.s32.totalorder %s23, 1
      %p41 = por %p39, %p40
      %p42 = scmp.ne.s32.totalorder %s31, %s32
      %p43 = scmp.eq.s32.totalorder %s23, 0
      %p44 = por %p42, %p43
      %p45 = scmp.ne.s32.totalorder %s31, %s32
      %p46 = scmp.eq.s32.totalorder %s24, 1
      %p47 = por %p45, %p46
      %p49 = scmp.ne.s32.totalorder %s32, %s48
      %p50 = scmp.eq.s32.totalorder %s24, 0
      %p51 = por %p49, %p50
      %s53 = sadd.s32 %s52, 1
      %p56 = scmp.eq.s32.totalorder %s18, 1
      %p57 = scmp.ne.s32.totalorder %s52, %s54
      %p58 = scmp.eq.s32.totalorder %s18, 0
      %p59 = por %p57, %p58
      %p60 = scmp.ne.s32.totalorder %s52, %s54
      %p61 = scmp.eq.s32.totalorder %s23, 1
      %p62 = por %p60, %p61
      %p63 = scmp.ne.s32.totalorder %s54, %s55
      %p64 = scmp.eq.s32.totalorder %s23, 0
      %p65 = por %p63, %p64
      %p66 = scmp.ne.s32.totalorder %s54, %s55
      %p67 = scmp.eq.s32.totalorder %s24, 1
      %p68 = por %p66, %p67
      %p70 = scmp.ne.s32.totalorder %s55, %s69
      %p71 = scmp.eq.s32.totalorder %s24, 0
      %p72 = por %p70, %p71
      %s74 = sadd.s32 %s73, 1
      %p77 = scmp.eq.s32.totalorder %s18, 1
      %p78 = scmp.ne.s32.totalorder %s73, %s75
      %p79 = scmp.eq.s32.totalorder %s18, 0
      %p80 = por %p78, %p79
      %p81 = scmp.ne.s32.totalorder %s73, %s75
      %p82 = scmp.eq.s32.totalorder %s23, 1
      %p83 = por %p81, %p82
      %p84 = scmp.ne.s32.totalorder %s75, %s76
      %p85 = scmp.eq.s32.totalorder %s23, 0
      %p86 = por %p84, %p85
      %p87 = scmp.ne.s32.totalorder %s75, %s76
      %p88 = scmp.eq.s32.totalorder %s24, 1
      %p89 = por %p87, %p88
      %p91 = scmp.ne.s32.totalorder %s76, %s90
      %p92 = scmp.eq.s32.totalorder %s24, 0
      %p93 = por %p91, %p92
      %s95 = sadd.s32 %s94, 1
      %p98 = scmp.eq.s32.totalorder %s18, 1
      %p99 = scmp.ne.s32.totalorder %s94, %s96
      %p100 = scmp.eq.s32.totalorder %s18, 0
      %p101 = por %p99, %p100
      %p102 = scmp.ne.s32.totalorder %s94, %s96
      %p103 = scmp.eq.s32.totalorder %s23, 1
      %p104 = por %p102, %p103
      %p105 = scmp.ne.s32.totalorder %s96, %s97
      %p106 = scmp.eq.s32.totalorder %s23, 0
      %p107 = por %p105, %p106
      %p108 = scmp.ne.s32.totalorder %s96, %s97
      %p109 = scmp.eq.s32.totalorder %s24, 1
      %p110 = por %p108, %p109
      %p112 = scmp.ne.s32.totalorder %s97, %s111
      %p113 = scmp.eq.s32.totalorder %s24, 0
      %p114 = por %p112, %p113
      %s116 = sadd.s32 %s115, 1
      %p119 = scmp.eq.s32.totalorder %s18, 1
      %p120 = scmp.ne.s32.totalorder %s115, %s117
      %p121 = scmp.eq.s32.totalorder %s18, 0
      %p122 = por %p120, %p121
      %p123 = scmp.ne.s32.totalorder %s115, %s117
      %p124 = scmp.eq.s32.totalorder %s23, 1
      %p125 = por %p123, %p124
      %p126 = scmp.ne.s32.totalorder %s117, %s118
      %p127 = scmp.eq.s32.totalorder %s23, 0
      %p128 = por %p126, %p127
      %p129 = scmp.ne.s32.totalorder %s117, %s118
      %p130 = scmp.eq.s32.totalorder %s24, 1
      %p131 = por %p129, %p130
      %p133 = scmp.ne.s32.totalorder %s118, %s132
      %p134 = scmp.eq.s32.totalorder %s24, 0
      %p135 = por %p133, %p134
      %s137 = sadd.s32 %s136, 1
      %p140 = scmp.eq.s32.totalorder %s18, 1
      %p141 = scmp.ne.s32.totalorder %s136, %s138
      %p142 = scmp.eq.s32.totalorder %s18, 0
      %p143 = por %p141, %p142
      %p144 = scmp.ne.s32.totalorder %s136, %s138
      %p145 = scmp.eq.s32.totalorder %s23, 1
      %p146 = por %p144, %p145
      %p147 = scmp.ne.s32.totalorder %s138, %s139
      %p148 = scmp.eq.s32.totalorder %s23, 0
      %p149 = por %p147, %p148
      %p150 = scmp.ne.s32.totalorder %s138, %s139
      %p151 = scmp.eq.s32.totalorder %s24, 1
      %p152 = por %p150, %p151
      %p154 = scmp.ne.s32.totalorder %s139, %s153
      %p155 = scmp.eq.s32.totalorder %s24, 0
      %p156 = por %p154, %p155
      %s158 = sadd.s32 %s157, 1
      %p161 = scmp.eq.s32.totalorder %s18, 1
      %p162 = scmp.ne.s32.totalorder %s157, %s159
      %p163 = scmp.eq.s32.totalorder %s18, 0
      %p164 = por %p162, %p163
      %p165 = scmp.ne.s32.totalorder %s157, %s159
      %p166 = scmp.eq.s32.totalorder %s23, 1
      %p167 = por %p165, %p166
      %p168 = scmp.ne.s32.totalorder %s159, %s160
      %p169 = scmp.eq.s32.totalorder %s23, 0
      %p170 = por %p168, %p169
      %p171 = scmp.ne.s32.totalorder %s159, %s160
      %p172 = scmp.eq.s32.totalorder %s24, 1
      %p173 = por %p171, %p172
      %p175 = scmp.ne.s32.totalorder %s160, %s174
      %p176 = scmp.eq.s32.totalorder %s24, 0
      %p177 = por %p175, %p176
      %s178 = ssub.s32 %s18, %s25
      %p179 = scmp.eq.s32.totalorder %s178, 0
      %s181 = sadd.s32 %s180, 1
      %s182 = scalar_select %p179, %s180, %s181
      %p185 = pneg %p179
      %p186 = scmp.eq.s32.totalorder %s18, 1
      %p187 = por %p185, %p186
      %p188 = scmp.ne.s32.totalorder %s180, %s183
      %p189 = scmp.eq.s32.totalorder %s18, 0
      %p190 = por %p188, %p189
      %p191 = scmp.ne.s32.totalorder %s180, %s183
      %p192 = scmp.eq.s32.totalorder %s23, 1
      %p193 = por %p191, %p192
      %p194 = scmp.ne.s32.totalorder %s183, %s184
      %p195 = scmp.eq.s32.totalorder %s23, 0
      %p196 = por %p194, %p195
      %p197 = scmp.ne.s32.totalorder %s183, %s184
      %p198 = scmp.eq.s32.totalorder %s24, 1
      %p199 = por %p197, %p198
      %p201 = scmp.ne.s32.totalorder %s184, %s200
      %p202 = scmp.eq.s32.totalorder %s24, 0
      %p203 = por %p201, %p202
      %p204 = scmp.le.s32.totalorder 1, %s18
      %p205 = scmp.lt.s32.totalorder %s18, 3
      %p206 = pnand %p204, %p205
      %p207 = pneg %p206
      // Predicated region
      $region9: #{tpu_custom_call.1} parent=5 // pred_check
        _
      $region10: #{tpu_custom_call.1} parent=5 // pred_check_branch
        %209 = sbr.rel (%p206) target = $region12
      $region11: #{tpu_custom_call.1} parent=5 // pred_region
        %s210 = ssub.s32 %s18, 1
        // Predicated region
        $region13: #{tpu_custom_call.1} parent=11 // pred_check
          %p211 = pneg %p65
        $region14: #{tpu_custom_call.1} parent=11 // pred_check_branch
          %213 = sbr.rel (%p211) target = $region16
        $region15: #{tpu_custom_call.1} parent=11 // pred_region
          _
        $region16: #{tpu_custom_call.1} parent=11 // pred_fallthru
          _
        // Predicated region
        $region17: #{tpu_custom_call.1} parent=11 // pred_check
          %p214 = pneg %p86
        $region18: #{tpu_custom_call.1} parent=11 // pred_check_branch
          %216 = sbr.rel (%p214) target = $region20
        $region19: #{tpu_custom_call.1} parent=11 // pred_region
          %s218 = ssub.s32 1024, 1024
          %219 = vsyncadd [#allocation5], %s218
          %s220 = sshll.u32 [#allocation4], 4
          %s221 = int_to_ptr.vmem [resolvable:$true] %s220
          %226 = dma.hbm_to_vmem [thread:$0]  %s2, 1024, %s221, [#allocation5], 128, 128, 8
        $region20: #{tpu_custom_call.1} parent=11 // pred_fallthru
          _
        // Predicated region
        $region21: #{tpu_custom_call.1} parent=11 // pred_check
          %p227 = pneg %p107
        $region22: #{tpu_custom_call.1} parent=11 // pred_check_branch
          %229 = sbr.rel (%p227) target = $region24
        $region23: #{tpu_custom_call.1} parent=11 // pred_region
          %s231 = ssub.s32 6144, 6144
          %232 = vsyncadd [#allocation8], %s231
          %s233 = sshll.u32 [#allocation7], 4
          %s234 = int_to_ptr.vmem [resolvable:$true] %s233
          %239 = dma.hbm_to_vmem [thread:$0]  %s3, 6144, %s234, [#allocation8], 128, 128, 8
        $region24: #{tpu_custom_call.1} parent=11 // pred_fallthru
          _
        // Predicated region
        $region25: #{tpu_custom_call.1} parent=11 // pred_check
          %p240 = pneg %p128
        $region26: #{tpu_custom_call.1} parent=11 // pred_check_branch
          %242 = sbr.rel (%p240) target = $region28
        $region27: #{tpu_custom_call.1} parent=11 // pred_region
          _
        $region28: #{tpu_custom_call.1} parent=11 // pred_fallthru
          _
        // Predicated region
        $region29: #{tpu_custom_call.1} parent=11 // pred_check
          %p243 = pneg %p149
        $region30: #{tpu_custom_call.1} parent=11 // pred_check_branch
          %245 = sbr.rel (%p243) target = $region32
        $region31: #{tpu_custom_call.1} parent=11 // pred_region
          %s247 = ssub.s32 12288, 12288
          %248 = vsyncadd [#allocation8], %s247
          %s249 = sshll.u32 [#allocation9], 4
          %s250 = int_to_ptr.vmem [resolvable:$true] %s249
          %255 = dma.hbm_to_vmem [thread:$0]  %s5, 12288, %s250, [#allocation8], 256, 256, 16
        $region32: #{tpu_custom_call.1} parent=11 // pred_fallthru
          _
        // Predicated region
        $region33: #{tpu_custom_call.1} parent=11 // pred_check
          %p256 = pneg %p170
        $region34: #{tpu_custom_call.1} parent=11 // pred_check_branch
          %258 = sbr.rel (%p256) target = $region36
        $region35: #{tpu_custom_call.1} parent=11 // pred_region
          _
        $region36: #{tpu_custom_call.1} parent=11 // pred_fallthru
          _
      $region12: #{tpu_custom_call.1} parent=5 // pred_fallthru
        _
      %p259 = scmp.lt.s32.totalorder %s18, 2
      // Predicated region
      $region37: #{tpu_custom_call.1} parent=5 // pred_check
        %p260 = pneg %p259
      $region38: #{tpu_custom_call.1} parent=5 // pred_check_branch
        %262 = sbr.rel (%p260) target = $region40
      $region39: #{tpu_custom_call.1} parent=5 // pred_region
        // Predicated region
        $region41: #{tpu_custom_call.1} parent=39 // pred_check
          %p263 = pneg %p38
        $region42: #{tpu_custom_call.1} parent=39 // pred_check_branch
          %265 = sbr.rel (%p263) target = $region44
        $region43: #{tpu_custom_call.1} parent=39 // pred_region
          %p266 = scmp.lt.s32.totalorder %s18, 1
          %s267 = scalar_select %p266, %s18, 1
          %s268 = smul.addr %s267, 2
          %s269 = smul.addr %s268, 8
          %s270 = scalar_lea.vmem %s0, %s269
        $region44: #{tpu_custom_call.1} parent=39 // pred_fallthru
          _
      $region40: #{tpu_custom_call.1} parent=5 // pred_fallthru
        _
      %p271 = scmp.le.s32.totalorder 1, %s18
      %p272 = scmp.lt.s32.totalorder %s18, 3
      %p273 = pnand %p271, %p272
      %p274 = pneg %p273
      // Predicated region
      $region45: #{tpu_custom_call.1} parent=5 // pred_check
        _
      $region46: #{tpu_custom_call.1} parent=5 // pred_check_branch
        %276 = sbr.rel (%p273) target = $region48
      $region47: #{tpu_custom_call.1} parent=5 // pred_region
        %s277 = ssub.s32 %s18, 1
        // Predicated region
        $region49: #{tpu_custom_call.1} parent=47 // pred_check
          %p278 = pneg %p86
        $region50: #{tpu_custom_call.1} parent=47 // pred_check_branch
          %280 = sbr.rel (%p278) target = $region52
        $region51: #{tpu_custom_call.1} parent=47 // pred_region
          %281 = dma.done [#allocation5], 1024
        $region52: #{tpu_custom_call.1} parent=47 // pred_fallthru
          _
        // Predicated region
        $region53: #{tpu_custom_call.1} parent=47 // pred_check
          %p282 = pneg %p107
        $region54: #{tpu_custom_call.1} parent=47 // pred_check_branch
          %284 = sbr.rel (%p282) target = $region56
        $region55: #{tpu_custom_call.1} parent=47 // pred_region
          %285 = dma.done [#allocation8], 6144
        $region56: #{tpu_custom_call.1} parent=47 // pred_fallthru
          _
        // Predicated region
        $region57: #{tpu_custom_call.1} parent=47 // pred_check
          %p286 = pneg %p149
        $region58: #{tpu_custom_call.1} parent=47 // pred_check_branch
          %288 = sbr.rel (%p286) target = $region60
        $region59: #{tpu_custom_call.1} parent=47 // pred_region
          %289 = dma.done [#allocation8], 12288
        $region60: #{tpu_custom_call.1} parent=47 // pred_fallthru
          _
        %p290 = scmp.lt.s32.totalorder %s23, 1
        %s291 = scalar_select %p290, %s23, 1
        %s292 = smul.addr %s291, 2
        %s293 = smul.addr %s292, 8
        %s294 = scalar_lea.vmem %s0, %s293
        %p295 = pneg %p44
        %p296 = pneg %p41
        %p297 = pneg %p65
        %p298 = pneg %p62
        %p299 = pneg %p86
        %p300 = pneg %p83
        %p301 = pneg %p107
        %p302 = pneg %p104
        %p303 = pneg %p128
        %p304 = pneg %p125
        %p305 = pneg %p149
        %p306 = pneg %p146
        %p307 = pneg %p170
        %p308 = pneg %p167
        %p309 = pneg %p196
        %p310 = pneg %p193
        %s311 = sand.u32 %s183, 1
        %s312 = scalar_lea.sflag [#allocation6], %s311
        %s313 = sand.u32 %s183, 1
        %s314 = smul.addr %s313, 64
        %s315 = scalar_lea.vmem [#allocation10], %s314
        %p316 = scmp.lt.s32.totalorder %s23, 1
        %s317 = scalar_select %p316, %s23, 1
        %s318 = smul.addr %s317, 2
        %s319 = smul.addr %s318, 8
        %s320 = scalar_lea.vmem %s0, %s319
        %v321 = vld [vmem:[%s320] sm:$0xff]
        %v322 = vld [vmem:[%s320 + $0x8] sm:$0xff]
        %v323 = vld [vmem:[%s1] sm:$0xff]
        %v324 = vld [vmem:[%s1 + $0x8] sm:$0xff]
        %v325 = vld [vmem:[%s1 + $0x10] sm:$0xff]
        %v326 = vld [vmem:[%s1 + $0x18] sm:$0xff]
        %vm327 = vcmask 130048
        %v329 = vsel %vm327, %v323, 0
        %v332 = vsel %vm327, %v324, 0
        %v335 = vsel %vm327, %v325, 0
        %v338 = vsel %vm327, %v326, 0
        %340 = vmatprep.subr.mxu0 0.0
        %341 = vmatpush1.msra.mxu0 0.0
        %342 = vmatprep.subr.mxu0 0.0
        %343 = vmatpush1.msra.mxu0 0.0
        %344 = vmatprep.subr.mxu0 0.0
        %345 = vmatpush1.msra.mxu0 0.0
        %346 = vmatprep.subr.mxu0 0.0
        %347 = vmatpush1.msra.mxu0 0.0
        %348 = vmatprep.subr.mxu0 0.0
        %349 = vmatpush1.msra.mxu0 0.0
        %350 = vmatprep.subr.mxu0 0.0
        %351 = vmatpush1.msra.mxu0 0.0
        %352 = vmatprep.subr.mxu0 0.0
        %353 = vmatpush1.msra.mxu0 0.0
        %354 = vmatprep.subr.mxu0 0.0
        %355 = vmatpush1.msra.mxu0 0.0
        %356 = vmatprep.subr.mxu0 0.0
        %357 = vmatpush1.msra.mxu0 0.0
        %358 = vmatprep.subr.mxu0 0.0
        %359 = vmatpush1.msra.mxu0 0.0
        %360 = vmatprep.subr.mxu0 0.0
        %361 = vmatpush1.msra.mxu0 0.0
        %362 = vmatprep.subr.mxu0 0.0
        %363 = vmatpush1.msra.mxu0 0.0
        %364 = vmatprep.subr.mxu0 0.0
        %365 = vmatpush1.msra.mxu0 0.0
        %366 = vmatprep.subr.mxu0 0.0
        %367 = vmatpush1.msra.mxu0 0.0
        %368 = vmatprep.subr.mxu0 0.0
        %369 = vmatpush1.msra.mxu0 %v322
        %370 = vmatprep.subr.mxu0 0.0
        %371 = vmatpush1.msra.mxu0 %v321
        %372 = vmatprep.subr.mxu0 0.0
        %373 = vmatpush2.msra.mxu0 0.0
        %374 = vmatprep.subr.mxu0 0.0
        %375 = vmatpush2.msra.mxu0 0.0
        %376 = vmatprep.subr.mxu0 0.0
        %377 = vmatpush2.msra.mxu0 0.0
        %378 = vmatprep.subr.mxu0 0.0
        %379 = vmatpush2.msra.mxu0 0.0
        %380 = vmatprep.subr.mxu0 0.0
        %381 = vmatpush2.msra.mxu0 0.0
        %382 = vmatprep.subr.mxu0 0.0
        %383 = vmatpush2.msra.mxu0 0.0
        %384 = vmatprep.subr.mxu0 0.0
        %385 = vmatpush2.msra.mxu0 0.0
        %386 = vmatprep.subr.mxu0 0.0
        %387 = vmatpush2.msra.mxu0 0.0
        %388 = vmatprep.subr.mxu0 0.0
        %389 = vmatpush2.msra.mxu0 0.0
        %390 = vmatprep.subr.mxu0 0.0
        %391 = vmatpush2.msra.mxu0 0.0
        %392 = vmatprep.subr.mxu0 0.0
        %393 = vmatpush2.msra.mxu0 0.0
        %394 = vmatprep.subr.mxu0 0.0
        %395 = vmatpush2.msra.mxu0 0.0
        %396 = vmatprep.subr.mxu0 0.0
        %397 = vmatpush2.msra.mxu0 0.0
        %398 = vmatprep.subr.mxu0 0.0
        %399 = vmatpush2.msra.mxu0 0.0
        %400 = vmatprep.subr.mxu0 0.0
        %401 = vmatpush2.msra.mxu0 0.0
        %402 = vmatprep.subr.mxu0 0.0
        %403 = vmatpush2.msra.mxu0 0.0
        %404 = vmatprep.mubr.f32.mxu0 0.0
        %405 = vmatmul.mubr.f32.gmra.mxu0 %v329
        %v406 = vpop.f32.mrf.mxu0
        %v407 = vadd.f32 0.0, %v406
        %v408 = vpop.f32.mrf.mxu0
        %409 = vmatprep.mubr.f32.mxu0 0.0
        %410 = vmatmul.mubr.f32.gmra.mxu0 %v332
        %v411 = vpop.f32.mrf.mxu0
        %v412 = vadd.f32 0.0, %v411
        %v413 = vpop.f32.mrf.mxu0
        %414 = vmatprep.mubr.f32.mxu0 0.0
        %415 = vmatmul.mubr.f32.gmra.mxu0 %v335
        %v416 = vpop.f32.mrf.mxu0
        %v417 = vadd.f32 0.0, %v416
        %v418 = vpop.f32.mrf.mxu0
        %419 = vmatprep.mubr.f32.mxu0 0.0
        %420 = vmatmul.mubr.f32.gmra.mxu0 %v338
        %v421 = vpop.f32.mrf.mxu0
        %v422 = vadd.f32 0.0, %v421
        %v423 = vpop.f32.mrf.mxu0
        %424 = vdwg.mxu0
        %v425 = vld [vmem:[#allocation4] sm:$0xff]
        %v426 = vld [vmem:[#allocation4 + $0x8] sm:$0xff]
        %v427 = vld [vmem:[#allocation4 + $0x10] sm:$0xff]
        %v428 = vld [vmem:[#allocation4 + $0x18] sm:$0xff]
        %v429 = vld [vmem:[#allocation4 + $0x20] sm:$0xff]
        %v430 = vld [vmem:[#allocation4 + $0x28] sm:$0xff]
        %v431 = vld [vmem:[#allocation4 + $0x30] sm:$0xff]
        %v432 = vld [vmem:[#allocation4 + $0x38] sm:$0xff]
        %vm433 = vcmask 523264
        %v435 = vsel %vm433, %v407, 0
        %v438 = vsel %vm433, %v412, 0
        %v441 = vsel %vm433, %v417, 0
        %v444 = vsel %vm433, %v422, 0
        %446 = vmatprep.subr.mxu0 0.0
        %447 = vmatpush1.msra.mxu0 0.0
        %448 = vmatprep.subr.mxu0 0.0
        %449 = vmatpush1.msra.mxu0 0.0
        %450 = vmatprep.subr.mxu0 0.0
        %451 = vmatpush1.msra.mxu0 0.0
        %452 = vmatprep.subr.mxu0 0.0
        %453 = vmatpush1.msra.mxu0 0.0
        %454 = vmatprep.subr.mxu0 0.0
        %455 = vmatpush1.msra.mxu0 0.0
        %456 = vmatprep.subr.mxu0 0.0
        %457 = vmatpush1.msra.mxu0 0.0
        %458 = vmatprep.subr.mxu0 0.0
        %459 = vmatpush1.msra.mxu0 0.0
        %460 = vmatprep.subr.mxu0 0.0
        %461 = vmatpush1.msra.mxu0 0.0
        %462 = vmatprep.subr.mxu0 0.0
        %463 = vmatpush1.msra.mxu0 %v432
        %464 = vmatprep.subr.mxu0 0.0
        %465 = vmatpush1.msra.mxu0 %v431
        %466 = vmatprep.subr.mxu0 0.0
        %467 = vmatpush1.msra.mxu0 %v430
        %468 = vmatprep.subr.mxu0 0.0
        %469 = vmatpush1.msra.mxu0 %v429
        %470 = vmatprep.subr.mxu0 0.0
        %471 = vmatpush1.msra.mxu0 %v428
        %472 = vmatprep.subr.mxu0 0.0
        %473 = vmatpush1.msra.mxu0 %v427
        %474 = vmatprep.subr.mxu0 0.0
        %475 = vmatpush1.msra.mxu0 %v426
        %476 = vmatprep.subr.mxu0 0.0
        %477 = vmatpush1.msra.mxu0 %v425
        %478 = vmatprep.subr.mxu0 0.0
        %479 = vmatpush2.msra.mxu0 0.0
        %480 = vmatprep.subr.mxu0 0.0
        %481 = vmatpush2.msra.mxu0 0.0
        %482 = vmatprep.subr.mxu0 0.0
        %483 = vmatpush2.msra.mxu0 0.0
        %484 = vmatprep.subr.mxu0 0.0
        %485 = vmatpush2.msra.mxu0 0.0
        %486 = vmatprep.subr.mxu0 0.0
        %487 = vmatpush2.msra.mxu0 0.0
        %488 = vmatprep.subr.mxu0 0.0
        %489 = vmatpush2.msra.mxu0 0.0
        %490 = vmatprep.subr.mxu0 0.0
        %491 = vmatpush2.msra.mxu0 0.0
        %492 = vmatprep.subr.mxu0 0.0
        %493 = vmatpush2.msra.mxu0 0.0
        %494 = vmatprep.subr.mxu0 0.0
        %495 = vmatpush2.msra.mxu0 0.0
        %496 = vmatprep.subr.mxu0 0.0
        %497 = vmatpush2.msra.mxu0 0.0
        %498 = vmatprep.subr.mxu0 0.0
        %499 = vmatpush2.msra.mxu0 0.0
        %500 = vmatprep.subr.mxu0 0.0
        %501 = vmatpush2.msra.mxu0 0.0
        %502 = vmatprep.subr.mxu0 0.0
        %503 = vmatpush2.msra.mxu0 0.0
        %504 = vmatprep.subr.mxu0 0.0
        %505 = vmatpush2.msra.mxu0 0.0
        %506 = vmatprep.subr.mxu0 0.0
        %507 = vmatpush2.msra.mxu0 0.0
        %508 = vmatprep.subr.mxu0 0.0
        %509 = vmatpush2.msra.mxu0 0.0
        %510 = vmatprep.mubr.f32.mxu0 0.0
        %511 = vmatmul.mubr.f32.gmra.mxu0 %v435
        %v512 = vpop.f32.mrf.mxu0
        %v513 = vadd.f32 0.0, %v512
        %v514 = vpop.f32.mrf.mxu0
        %515 = vmatprep.mubr.f32.mxu0 0.0
        %516 = vmatmul.mubr.f32.gmra.mxu0 %v438
        %v517 = vpop.f32.mrf.mxu0
        %v518 = vadd.f32 0.0, %v517
        %v519 = vpop.f32.mrf.mxu0
        %520 = vmatprep.mubr.f32.mxu0 0.0
        %521 = vmatmul.mubr.f32.gmra.mxu0 %v441
        %v522 = vpop.f32.mrf.mxu0
        %v523 = vadd.f32 0.0, %v522
        %v524 = vpop.f32.mrf.mxu0
        %525 = vmatprep.mubr.f32.mxu0 0.0
        %526 = vmatmul.mubr.f32.gmra.mxu0 %v444
        %v527 = vpop.f32.mrf.mxu0
        %v528 = vadd.f32 0.0, %v527
        %v529 = vpop.f32.mrf.mxu0
        %530 = vdwg.mxu0
        %531 = vst [vmem:[#allocation2] sm:$0x1] 0.0
        %532 = vst [vmem:[#allocation2 + $0x21] sm:$0x1] 0.0
        %533 = vst [vmem:[#allocation2 + $0x1] sm:$0xff] %v513
        %534 = vst [vmem:[#allocation2 + $0x9] sm:$0xff] %v518
        %535 = vst [vmem:[#allocation2 + $0x11] sm:$0xff] %v523
        %536 = vst [vmem:[#allocation2 + $0x19] sm:$0xff] %v528
        %v537 = vld [vmem:[#allocation2] sm:$0xff]
        %v538 = vld [vmem:[#allocation2 + $0x8] sm:$0xff]
        %v539 = vld [vmem:[#allocation2 + $0x10] sm:$0xff]
        %v540 = vld [vmem:[#allocation2 + $0x18] sm:$0xff]
        %v541 = vld [vmem:[#allocation7] sm:$0xff]
        %v542 = vld [vmem:[#allocation7 + $0x8] sm:$0xff]
        %v543 = vld [vmem:[#allocation7 + $0x10] sm:$0xff]
        %v544 = vld [vmem:[#allocation7 + $0x18] sm:$0xff]
        %v545 = vld [vmem:[#allocation7 + $0x20] sm:$0xff]
        %v546 = vld [vmem:[#allocation7 + $0x28] sm:$0xff]
        %v547 = vld [vmem:[#allocation7 + $0x30] sm:$0xff]
        %v548 = vld [vmem:[#allocation7 + $0x38] sm:$0xff]
        %v549 = vld [vmem:[#allocation7 + $0x40] sm:$0xff]
        %v550 = vld [vmem:[#allocation7 + $0x48] sm:$0xff]
        %v551 = vld [vmem:[#allocation7 + $0x50] sm:$0xff]
        %v552 = vld [vmem:[#allocation7 + $0x58] sm:$0xff]
        %v553 = vld [vmem:[#allocation7 + $0x60] sm:$0xff]
        %v554 = vld [vmem:[#allocation7 + $0x68] sm:$0xff]
        %v555 = vld [vmem:[#allocation7 + $0x70] sm:$0xff]
        %v556 = vld [vmem:[#allocation7 + $0x78] sm:$0xff]
        %v557 = vld [vmem:[#allocation2 + $0x1] sm:$0xff]
        %v558 = vld [vmem:[#allocation2 + $0x9] sm:$0xff]
        %v559 = vld [vmem:[#allocation2 + $0x11] sm:$0xff]
        %v560 = vld [vmem:[#allocation2 + $0x19] sm:$0xff]
        %s561 = scalar_lea.vmem [#allocation7], 128
        %v562 = vld [vmem:[%s561] sm:$0xff]
        %v563 = vld [vmem:[%s561 + $0x8] sm:$0xff]
        %v564 = vld [vmem:[%s561 + $0x10] sm:$0xff]
        %v565 = vld [vmem:[%s561 + $0x18] sm:$0xff]
        %v566 = vld [vmem:[%s561 + $0x20] sm:$0xff]
        %v567 = vld [vmem:[%s561 + $0x28] sm:$0xff]
        %v568 = vld [vmem:[%s561 + $0x30] sm:$0xff]
        %v569 = vld [vmem:[%s561 + $0x38] sm:$0xff]
        %v570 = vld [vmem:[%s561 + $0x40] sm:$0xff]
        %v571 = vld [vmem:[%s561 + $0x48] sm:$0xff]
        %v572 = vld [vmem:[%s561 + $0x50] sm:$0xff]
        %v573 = vld [vmem:[%s561 + $0x58] sm:$0xff]
        %v574 = vld [vmem:[%s561 + $0x60] sm:$0xff]
        %v575 = vld [vmem:[%s561 + $0x68] sm:$0xff]
        %v576 = vld [vmem:[%s561 + $0x70] sm:$0xff]
        %v577 = vld [vmem:[%s561 + $0x78] sm:$0xff]
        %578 = vmatprep.subr.mxu0 0.0
        %579 = vmatpush1.msra.mxu0 %v577
        %580 = vmatprep.subr.mxu0 0.0
        %581 = vmatpush1.msra.mxu0 %v576
        %582 = vmatprep.subr.mxu0 0.0
        %583 = vmatpush1.msra.mxu0 %v575
        %584 = vmatprep.subr.mxu0 0.0
        %585 = vmatpush1.msra.mxu0 %v574
        %586 = vmatprep.subr.mxu0 0.0
        %587 = vmatpush1.msra.mxu0 %v573
        %588 = vmatprep.subr.mxu0 0.0
        %589 = vmatpush1.msra.mxu0 %v572
        %590 = vmatprep.subr.mxu0 0.0
        %591 = vmatpush1.msra.mxu0 %v571
        %592 = vmatprep.subr.mxu0 0.0
        %593 = vmatpush1.msra.mxu0 %v570
        %594 = vmatprep.subr.mxu0 0.0
        %595 = vmatpush1.msra.mxu0 %v569
        %596 = vmatprep.subr.mxu0 0.0
        %597 = vmatpush1.msra.mxu0 %v568
        %598 = vmatprep.subr.mxu0 0.0
        %599 = vmatpush1.msra.mxu0 %v567
        %600 = vmatprep.subr.mxu0 0.0
        %601 = vmatpush1.msra.mxu0 %v566
        %602 = vmatprep.subr.mxu0 0.0
        %603 = vmatpush1.msra.mxu0 %v565
        %604 = vmatprep.subr.mxu0 0.0
        %605 = vmatpush1.msra.mxu0 %v564
        %606 = vmatprep.subr.mxu0 0.0
        %607 = vmatpush1.msra.mxu0 %v563
        %608 = vmatprep.subr.mxu0 0.0
        %609 = vmatpush1.msra.mxu0 %v562
        %610 = vmatprep.subr.mxu0 0.0
        %611 = vmatpush2.msra.mxu0 0.0
        %612 = vmatprep.subr.mxu0 0.0
        %613 = vmatpush2.msra.mxu0 0.0
        %614 = vmatprep.subr.mxu0 0.0
        %615 = vmatpush2.msra.mxu0 0.0
        %616 = vmatprep.subr.mxu0 0.0
        %617 = vmatpush2.msra.mxu0 0.0
        %618 = vmatprep.subr.mxu0 0.0
        %619 = vmatpush2.msra.mxu0 0.0
        %620 = vmatprep.subr.mxu0 0.0
        %621 = vmatpush2.msra.mxu0 0.0
        %622 = vmatprep.subr.mxu0 0.0
        %623 = vmatpush2.msra.mxu0 0.0
        %624 = vmatprep.subr.mxu0 0.0
        %625 = vmatpush2.msra.mxu0 0.0
        %626 = vmatprep.subr.mxu0 0.0
        %627 = vmatpush2.msra.mxu0 0.0
        %628 = vmatprep.subr.mxu0 0.0
        %629 = vmatpush2.msra.mxu0 0.0
        %630 = vmatprep.subr.mxu0 0.0
        %631 = vmatpush2.msra.mxu0 0.0
        %632 = vmatprep.subr.mxu0 0.0
        %633 = vmatpush2.msra.mxu0 0.0
        %634 = vmatprep.subr.mxu0 0.0
        %635 = vmatpush2.msra.mxu0 0.0
        %636 = vmatprep.subr.mxu0 0.0
        %637 = vmatpush2.msra.mxu0 0.0
        %638 = vmatprep.subr.mxu0 0.0
        %639 = vmatpush2.msra.mxu0 0.0
        %640 = vmatprep.subr.mxu0 0.0
        %641 = vmatpush2.msra.mxu0 0.0
        %642 = vmatprep.mubr.f32.mxu0 0.0
        %643 = vmatmul.mubr.f32.gmra.mxu0 %v557
        %v644 = vpop.f32.mrf.mxu0
        %v645 = vadd.f32 0.0, %v644
        %v646 = vpop.f32.mrf.mxu0
        %647 = vmatprep.mubr.f32.mxu0 0.0
        %648 = vmatmul.mubr.f32.gmra.mxu0 %v558
        %v649 = vpop.f32.mrf.mxu0
        %v650 = vadd.f32 0.0, %v649
        %v651 = vpop.f32.mrf.mxu0
        %652 = vmatprep.mubr.f32.mxu0 0.0
        %653 = vmatmul.mubr.f32.gmra.mxu0 %v559
        %v654 = vpop.f32.mrf.mxu0
        %v655 = vadd.f32 0.0, %v654
        %v656 = vpop.f32.mrf.mxu0
        %657 = vmatprep.mubr.f32.mxu0 0.0
        %658 = vmatmul.mubr.f32.gmra.mxu0 %v560
        %v659 = vpop.f32.mrf.mxu0
        %v660 = vadd.f32 0.0, %v659
        %v661 = vpop.f32.mrf.mxu0
        %662 = vdwg.mxu0
        %663 = vmatprep.subr.mxu0 0.0
        %664 = vmatpush1.msra.mxu0 %v556
        %665 = vmatprep.subr.mxu0 0.0
        %666 = vmatpush1.msra.mxu0 %v555
        %667 = vmatprep.subr.mxu0 0.0
        %668 = vmatpush1.msra.mxu0 %v554
        %669 = vmatprep.subr.mxu0 0.0
        %670 = vmatpush1.msra.mxu0 %v553
        %671 = vmatprep.subr.mxu0 0.0
        %672 = vmatpush1.msra.mxu0 %v552
        %673 = vmatprep.subr.mxu0 0.0
        %674 = vmatpush1.msra.mxu0 %v551
        %675 = vmatprep.subr.mxu0 0.0
        %676 = vmatpush1.msra.mxu0 %v550
        %677 = vmatprep.subr.mxu0 0.0
        %678 = vmatpush1.msra.mxu0 %v549
        %679 = vmatprep.subr.mxu0 0.0
        %680 = vmatpush1.msra.mxu0 %v548
        %681 = vmatprep.subr.mxu0 0.0
        %682 = vmatpush1.msra.mxu0 %v547
        %683 = vmatprep.subr.mxu0 0.0
        %684 = vmatpush1.msra.mxu0 %v546
        %685 = vmatprep.subr.mxu0 0.0
        %686 = vmatpush1.msra.mxu0 %v545
        %687 = vmatprep.subr.mxu0 0.0
        %688 = vmatpush1.msra.mxu0 %v544
        %689 = vmatprep.subr.mxu0 0.0
        %690 = vmatpush1.msra.mxu0 %v543
        %691 = vmatprep.subr.mxu0 0.0
        %692 = vmatpush1.msra.mxu0 %v542
        %693 = vmatprep.subr.mxu0 0.0
        %694 = vmatpush1.msra.mxu0 %v541
        %695 = vmatprep.subr.mxu0 0.0
        %696 = vmatpush2.msra.mxu0 0.0
        %697 = vmatprep.subr.mxu0 0.0
        %698 = vmatpush2.msra.mxu0 0.0
        %699 = vmatprep.subr.mxu0 0.0
        %700 = vmatpush2.msra.mxu0 0.0
        %701 = vmatprep.subr.mxu0 0.0
        %702 = vmatpush2.msra.mxu0 0.0
        %703 = vmatprep.subr.mxu0 0.0
        %704 = vmatpush2.msra.mxu0 0.0
        %705 = vmatprep.subr.mxu0 0.0
        %706 = vmatpush2.msra.mxu0 0.0
        %707 = vmatprep.subr.mxu0 0.0
        %708 = vmatpush2.msra.mxu0 0.0
        %709 = vmatprep.subr.mxu0 0.0
        %710 = vmatpush2.msra.mxu0 0.0
        %711 = vmatprep.subr.mxu0 0.0
        %712 = vmatpush2.msra.mxu0 0.0
        %713 = vmatprep.subr.mxu0 0.0
        %714 = vmatpush2.msra.mxu0 0.0
        %715 = vmatprep.subr.mxu0 0.0
        %716 = vmatpush2.msra.mxu0 0.0
        %717 = vmatprep.subr.mxu0 0.0
        %718 = vmatpush2.msra.mxu0 0.0
        %719 = vmatprep.subr.mxu0 0.0
        %720 = vmatpush2.msra.mxu0 0.0
        %721 = vmatprep.subr.mxu0 0.0
        %722 = vmatpush2.msra.mxu0 0.0
        %723 = vmatprep.subr.mxu0 0.0
        %724 = vmatpush2.msra.mxu0 0.0
        %725 = vmatprep.subr.mxu0 0.0
        %726 = vmatpush2.msra.mxu0 0.0
        %727 = vmatprep.mubr.f32.mxu0 0.0
        %728 = vmatmul.mubr.f32.gmra.mxu0 %v537
        %v729 = vpop.f32.mrf.mxu0
        %v730 = vadd.f32 %v645, %v729
        %v731 = vpop.f32.mrf.mxu0
        %732 = vmatprep.mubr.f32.mxu0 0.0
        %733 = vmatmul.mubr.f32.gmra.mxu0 %v538
        %v734 = vpop.f32.mrf.mxu0
        %v735 = vadd.f32 %v650, %v734
        %v736 = vpop.f32.mrf.mxu0
        %737 = vmatprep.mubr.f32.mxu0 0.0
        %738 = vmatmul.mubr.f32.gmra.mxu0 %v539
        %v739 = vpop.f32.mrf.mxu0
        %v740 = vadd.f32 %v655, %v739
        %v741 = vpop.f32.mrf.mxu0
        %742 = vmatprep.mubr.f32.mxu0 0.0
        %743 = vmatmul.mubr.f32.gmra.mxu0 %v540
        %v744 = vpop.f32.mrf.mxu0
        %v745 = vadd.f32 %v660, %v744
        %v746 = vpop.f32.mrf.mxu0
        %747 = vdwg.mxu0
        %v748 = vld [vmem:[#allocation2 + $0x2] sm:$0xff]
        %v749 = vld [vmem:[#allocation2 + $0xa] sm:$0xff]
        %v750 = vld [vmem:[#allocation2 + $0x12] sm:$0xff]
        %v751 = vld [vmem:[#allocation2 + $0x1a] sm:$0xff]
        %s752 = scalar_lea.vmem [#allocation7], 256
        %v753 = vld [vmem:[%s752] sm:$0xff]
        %v754 = vld [vmem:[%s752 + $0x8] sm:$0xff]
        %v755 = vld [vmem:[%s752 + $0x10] sm:$0xff]
        %v756 = vld [vmem:[%s752 + $0x18] sm:$0xff]
        %v757 = vld [vmem:[%s752 + $0x20] sm:$0xff]
        %v758 = vld [vmem:[%s752 + $0x28] sm:$0xff]
        %v759 = vld [vmem:[%s752 + $0x30] sm:$0xff]
        %v760 = vld [vmem:[%s752 + $0x38] sm:$0xff]
        %v761 = vld [vmem:[%s752 + $0x40] sm:$0xff]
        %v762 = vld [vmem:[%s752 + $0x48] sm:$0xff]
        %v763 = vld [vmem:[%s752 + $0x50] sm:$0xff]
        %v764 = vld [vmem:[%s752 + $0x58] sm:$0xff]
        %v765 = vld [vmem:[%s752 + $0x60] sm:$0xff]
        %v766 = vld [vmem:[%s752 + $0x68] sm:$0xff]
        %v767 = vld [vmem:[%s752 + $0x70] sm:$0xff]
        %v768 = vld [vmem:[%s752 + $0x78] sm:$0xff]
        %769 = vmatprep.subr.mxu0 0.0
        %770 = vmatpush1.msra.mxu0 %v768
        %771 = vmatprep.subr.mxu0 0.0
        %772 = vmatpush1.msra.mxu0 %v767
        %773 = vmatprep.subr.mxu0 0.0
        %774 = vmatpush1.msra.mxu0 %v766
        %775 = vmatprep.subr.mxu0 0.0
        %776 = vmatpush1.msra.mxu0 %v765
        %777 = vmatprep.subr.mxu0 0.0
        %778 = vmatpush1.msra.mxu0 %v764
        %779 = vmatprep.subr.mxu0 0.0
        %780 = vmatpush1.msra.mxu0 %v763
        %781 = vmatprep.subr.mxu0 0.0
        %782 = vmatpush1.msra.mxu0 %v762
        %783 = vmatprep.subr.mxu0 0.0
        %784 = vmatpush1.msra.mxu0 %v761
        %785 = vmatprep.subr.mxu0 0.0
        %786 = vmatpush1.msra.mxu0 %v760
        %787 = vmatprep.subr.mxu0 0.0
        %788 = vmatpush1.msra.mxu0 %v759
        %789 = vmatprep.subr.mxu0 0.0
        %790 = vmatpush1.msra.mxu0 %v758
        %791 = vmatprep.subr.mxu0 0.0
        %792 = vmatpush1.msra.mxu0 %v757
        %793 = vmatprep.subr.mxu0 0.0
        %794 = vmatpush1.msra.mxu0 %v756
        %795 = vmatprep.subr.mxu0 0.0
        %796 = vmatpush1.msra.mxu0 %v755
        %797 = vmatprep.subr.mxu0 0.0
        %798 = vmatpush1.msra.mxu0 %v754
        %799 = vmatprep.subr.mxu0 0.0
        %800 = vmatpush1.msra.mxu0 %v753
        %801 = vmatprep.subr.mxu0 0.0
        %802 = vmatpush2.msra.mxu0 0.0
        %803 = vmatprep.subr.mxu0 0.0
        %804 = vmatpush2.msra.mxu0 0.0
        %805 = vmatprep.subr.mxu0 0.0
        %806 = vmatpush2.msra.mxu0 0.0
        %807 = vmatprep.subr.mxu0 0.0
        %808 = vmatpush2.msra.mxu0 0.0
        %809 = vmatprep.subr.mxu0 0.0
        %810 = vmatpush2.msra.mxu0 0.0
        %811 = vmatprep.subr.mxu0 0.0
        %812 = vmatpush2.msra.mxu0 0.0
        %813 = vmatprep.subr.mxu0 0.0
        %814 = vmatpush2.msra.mxu0 0.0
        %815 = vmatprep.subr.mxu0 0.0
        %816 = vmatpush2.msra.mxu0 0.0
        %817 = vmatprep.subr.mxu0 0.0
        %818 = vmatpush2.msra.mxu0 0.0
        %819 = vmatprep.subr.mxu0 0.0
        %820 = vmatpush2.msra.mxu0 0.0
        %821 = vmatprep.subr.mxu0 0.0
        %822 = vmatpush2.msra.mxu0 0.0
        %823 = vmatprep.subr.mxu0 0.0
        %824 = vmatpush2.msra.mxu0 0.0
        %825 = vmatprep.subr.mxu0 0.0
        %826 = vmatpush2.msra.mxu0 0.0
        %827 = vmatprep.subr.mxu0 0.0
        %828 = vmatpush2.msra.mxu0 0.0
        %829 = vmatprep.subr.mxu0 0.0
        %830 = vmatpush2.msra.mxu0 0.0
        %831 = vmatprep.subr.mxu0 0.0
        %832 = vmatpush2.msra.mxu0 0.0
        %833 = vmatprep.mubr.f32.mxu0 0.0
        %834 = vmatmul.mubr.f32.gmra.mxu0 %v748
        %v835 = vpop.f32.mrf.mxu0
        %v836 = vadd.f32 0.0, %v835
        %v837 = vpop.f32.mrf.mxu0
        %838 = vmatprep.mubr.f32.mxu0 0.0
        %839 = vmatmul.mubr.f32.gmra.mxu0 %v749
        %v840 = vpop.f32.mrf.mxu0
        %v841 = vadd.f32 0.0, %v840
        %v842 = vpop.f32.mrf.mxu0
        %843 = vmatprep.mubr.f32.mxu0 0.0
        %844 = vmatmul.mubr.f32.gmra.mxu0 %v750
        %v845 = vpop.f32.mrf.mxu0
        %v846 = vadd.f32 0.0, %v845
        %v847 = vpop.f32.mrf.mxu0
        %848 = vmatprep.mubr.f32.mxu0 0.0
        %849 = vmatmul.mubr.f32.gmra.mxu0 %v751
        %v850 = vpop.f32.mrf.mxu0
        %v851 = vadd.f32 0.0, %v850
        %v852 = vpop.f32.mrf.mxu0
        %853 = vdwg.mxu0
        %v854 = vadd.f32 %v730, %v836
        %v855 = vadd.f32 %v735, %v841
        %v856 = vadd.f32 %v740, %v846
        %v857 = vadd.f32 %v745, %v851
        %v858 = vld [vmem:[%s4] sm:$0x1]
        %v860 = vlaneseq
        %v861 = vshrl.u32 %v860, 7
        %v862 = vsub.s32 0, %v861
        %v863 = vrot.slane %v858, %v862
        %v865 = vadd.f32 %v854, %v863
        %v866 = vadd.f32 %v855, %v863
        %v867 = vadd.f32 %v856, %v863
        %v868 = vadd.f32 %v857, %v863
        %v869 = vmax.f32 %v865, 0.0
        %v870 = vmax.f32 %v866, 0.0
        %v871 = vmax.f32 %v867, 0.0
        %v872 = vmax.f32 %v868, 0.0
        %873 = vst [vmem:[#allocation3] sm:$0x1] 0.0
        %874 = vst [vmem:[#allocation3 + $0x21] sm:$0x1] 0.0
        %875 = vst [vmem:[#allocation3 + $0x1] sm:$0xff] %v869
        %876 = vst [vmem:[#allocation3 + $0x9] sm:$0xff] %v870
        %877 = vst [vmem:[#allocation3 + $0x11] sm:$0xff] %v871
        %878 = vst [vmem:[#allocation3 + $0x19] sm:$0xff] %v872
        %v879 = vld [vmem:[#allocation3] sm:$0xff]
        %v880 = vld [vmem:[#allocation3 + $0x8] sm:$0xff]
        %v881 = vld [vmem:[#allocation3 + $0x10] sm:$0xff]
        %v882 = vld [vmem:[#allocation3 + $0x18] sm:$0xff]
        %v883 = vld [vmem:[#allocation9] sm:$0xff]
        %v884 = vld [vmem:[#allocation9 + $0x8] sm:$0xff]
        %v885 = vld [vmem:[#allocation9 + $0x10] sm:$0xff]
        %v886 = vld [vmem:[#allocation9 + $0x18] sm:$0xff]
        %v887 = vld [vmem:[#allocation9 + $0x20] sm:$0xff]
        %v888 = vld [vmem:[#allocation9 + $0x28] sm:$0xff]
        %v889 = vld [vmem:[#allocation9 + $0x30] sm:$0xff]
        %v890 = vld [vmem:[#allocation9 + $0x38] sm:$0xff]
        %v891 = vld [vmem:[#allocation9 + $0x40] sm:$0xff]
        %v892 = vld [vmem:[#allocation9 + $0x48] sm:$0xff]
        %v893 = vld [vmem:[#allocation9 + $0x50] sm:$0xff]
        %v894 = vld [vmem:[#allocation9 + $0x58] sm:$0xff]
        %v895 = vld [vmem:[#allocation9 + $0x60] sm:$0xff]
        %v896 = vld [vmem:[#allocation9 + $0x68] sm:$0xff]
        %v897 = vld [vmem:[#allocation9 + $0x70] sm:$0xff]
        %v898 = vld [vmem:[#allocation9 + $0x78] sm:$0xff]
        %v899 = vld [vmem:[#allocation9 + $0x80] sm:$0xff]
        %v900 = vld [vmem:[#allocation9 + $0x88] sm:$0xff]
        %v901 = vld [vmem:[#allocation9 + $0x90] sm:$0xff]
        %v902 = vld [vmem:[#allocation9 + $0x98] sm:$0xff]
        %v903 = vld [vmem:[#allocation9 + $0xa0] sm:$0xff]
        %v904 = vld [vmem:[#allocation9 + $0xa8] sm:$0xff]
        %v905 = vld [vmem:[#allocation9 + $0xb0] sm:$0xff]
        %v906 = vld [vmem:[#allocation9 + $0xb8] sm:$0xff]
        %v907 = vld [vmem:[#allocation9 + $0xc0] sm:$0xff]
        %v908 = vld [vmem:[#allocation9 + $0xc8] sm:$0xff]
        %v909 = vld [vmem:[#allocation9 + $0xd0] sm:$0xff]
        %v910 = vld [vmem:[#allocation9 + $0xd8] sm:$0xff]
        %v911 = vld [vmem:[#allocation9 + $0xe0] sm:$0xff]
        %v912 = vld [vmem:[#allocation9 + $0xe8] sm:$0xff]
        %v913 = vld [vmem:[#allocation9 + $0xf0] sm:$0xff]
        %v914 = vld [vmem:[#allocation9 + $0xf8] sm:$0xff]
        %v915 = vld [vmem:[#allocation3 + $0x1] sm:$0xff]
        %v916 = vld [vmem:[#allocation3 + $0x9] sm:$0xff]
        %v917 = vld [vmem:[#allocation3 + $0x11] sm:$0xff]
        %v918 = vld [vmem:[#allocation3 + $0x19] sm:$0xff]
        %s919 = scalar_lea.vmem [#allocation9], 256
        %v920 = vld [vmem:[%s919] sm:$0xff]
        %v921 = vld [vmem:[%s919 + $0x8] sm:$0xff]
        %v922 = vld [vmem:[%s919 + $0x10] sm:$0xff]
        %v923 = vld [vmem:[%s919 + $0x18] sm:$0xff]
        %v924 = vld [vmem:[%s919 + $0x20] sm:$0xff]
        %v925 = vld [vmem:[%s919 + $0x28] sm:$0xff]
        %v926 = vld [vmem:[%s919 + $0x30] sm:$0xff]
        %v927 = vld [vmem:[%s919 + $0x38] sm:$0xff]
        %v928 = vld [vmem:[%s919 + $0x40] sm:$0xff]
        %v929 = vld [vmem:[%s919 + $0x48] sm:$0xff]
        %v930 = vld [vmem:[%s919 + $0x50] sm:$0xff]
        %v931 = vld [vmem:[%s919 + $0x58] sm:$0xff]
        %v932 = vld [vmem:[%s919 + $0x60] sm:$0xff]
        %v933 = vld [vmem:[%s919 + $0x68] sm:$0xff]
        %v934 = vld [vmem:[%s919 + $0x70] sm:$0xff]
        %v935 = vld [vmem:[%s919 + $0x78] sm:$0xff]
        %v936 = vld [vmem:[%s919 + $0x80] sm:$0xff]
        %v937 = vld [vmem:[%s919 + $0x88] sm:$0xff]
        %v938 = vld [vmem:[%s919 + $0x90] sm:$0xff]
        %v939 = vld [vmem:[%s919 + $0x98] sm:$0xff]
        %v940 = vld [vmem:[%s919 + $0xa0] sm:$0xff]
        %v941 = vld [vmem:[%s919 + $0xa8] sm:$0xff]
        %v942 = vld [vmem:[%s919 + $0xb0] sm:$0xff]
        %v943 = vld [vmem:[%s919 + $0xb8] sm:$0xff]
        %v944 = vld [vmem:[%s919 + $0xc0] sm:$0xff]
        %v945 = vld [vmem:[%s919 + $0xc8] sm:$0xff]
        %v946 = vld [vmem:[%s919 + $0xd0] sm:$0xff]
        %v947 = vld [vmem:[%s919 + $0xd8] sm:$0xff]
        %v948 = vld [vmem:[%s919 + $0xe0] sm:$0xff]
        %v949 = vld [vmem:[%s919 + $0xe8] sm:$0xff]
        %v950 = vld [vmem:[%s919 + $0xf0] sm:$0xff]
        %v951 = vld [vmem:[%s919 + $0xf8] sm:$0xff]
        %952 = vmatprep.subr.mxu0 %v951
        %953 = vmatpush1.msra.mxu0 %v950
        %954 = vmatprep.subr.mxu0 %v949
        %955 = vmatpush1.msra.mxu0 %v948
        %956 = vmatprep.subr.mxu0 %v947
        %957 = vmatpush1.msra.mxu0 %v946
        %958 = vmatprep.subr.mxu0 %v945
        %959 = vmatpush1.msra.mxu0 %v944
        %960 = vmatprep.subr.mxu0 %v943
        %961 = vmatpush1.msra.mxu0 %v942
        %962 = vmatprep.subr.mxu0 %v941
        %963 = vmatpush1.msra.mxu0 %v940
        %964 = vmatprep.subr.mxu0 %v939
        %965 = vmatpush1.msra.mxu0 %v938
        %966 = vmatprep.subr.mxu0 %v937
        %967 = vmatpush1.msra.mxu0 %v936
        %968 = vmatprep.subr.mxu0 %v935
        %969 = vmatpush1.msra.mxu0 %v934
        %970 = vmatprep.subr.mxu0 %v933
        %971 = vmatpush1.msra.mxu0 %v932
        %972 = vmatprep.subr.mxu0 %v931
        %973 = vmatpush1.msra.mxu0 %v930
        %974 = vmatprep.subr.mxu0 %v929
        %975 = vmatpush1.msra.mxu0 %v928
        %976 = vmatprep.subr.mxu0 %v927
        %977 = vmatpush1.msra.mxu0 %v926
        %978 = vmatprep.subr.mxu0 %v925
        %979 = vmatpush1.msra.mxu0 %v924
        %980 = vmatprep.subr.mxu0 %v923
        %981 = vmatpush1.msra.mxu0 %v922
        %982 = vmatprep.subr.mxu0 %v921
        %983 = vmatpush1.msra.mxu0 %v920
        %984 = vmatprep.subr.mxu0 0.0
        %985 = vmatpush2.msra.mxu0 0.0
        %986 = vmatprep.subr.mxu0 0.0
        %987 = vmatpush2.msra.mxu0 0.0
        %988 = vmatprep.subr.mxu0 0.0
        %989 = vmatpush2.msra.mxu0 0.0
        %990 = vmatprep.subr.mxu0 0.0
        %991 = vmatpush2.msra.mxu0 0.0
        %992 = vmatprep.subr.mxu0 0.0
        %993 = vmatpush2.msra.mxu0 0.0
        %994 = vmatprep.subr.mxu0 0.0
        %995 = vmatpush2.msra.mxu0 0.0
        %996 = vmatprep.subr.mxu0 0.0
        %997 = vmatpush2.msra.mxu0 0.0
        %998 = vmatprep.subr.mxu0 0.0
        %999 = vmatpush2.msra.mxu0 0.0
        %1000 = vmatprep.subr.mxu0 0.0
        %1001 = vmatpush2.msra.mxu0 0.0
        %1002 = vmatprep.subr.mxu0 0.0
        %1003 = vmatpush2.msra.mxu0 0.0
        %1004 = vmatprep.subr.mxu0 0.0
        %1005 = vmatpush2.msra.mxu0 0.0
        %1006 = vmatprep.subr.mxu0 0.0
        %1007 = vmatpush2.msra.mxu0 0.0
        %1008 = vmatprep.subr.mxu0 0.0
        %1009 = vmatpush2.msra.mxu0 0.0
        %1010 = vmatprep.subr.mxu0 0.0
        %1011 = vmatpush2.msra.mxu0 0.0
        %1012 = vmatprep.subr.mxu0 0.0
        %1013 = vmatpush2.msra.mxu0 0.0
        %1014 = vmatprep.subr.mxu0 0.0
        %1015 = vmatpush2.msra.mxu0 0.0
        %1016 = vmatprep.mubr.f32.mxu0 0.0
        %1017 = vmatmul.mubr.f32.gmra.mxu0 %v915
        %v1018 = vpop.f32.mrf.mxu0
        %v1019 = vadd.f32 0.0, %v1018
        %v1020 = vpop.f32.mrf.mxu0
        %v1021 = vadd.f32 0.0, %v1020
        %1022 = vmatprep.mubr.f32.mxu0 0.0
        %1023 = vmatmul.mubr.f32.gmra.mxu0 %v916
        %v1024 = vpop.f32.mrf.mxu0
        %v1025 = vadd.f32 0.0, %v1024
        %v1026 = vpop.f32.mrf.mxu0
        %v1027 = vadd.f32 0.0, %v1026
        %1028 = vmatprep.mubr.f32.mxu0 0.0
        %1029 = vmatmul.mubr.f32.gmra.mxu0 %v917
        %v1030 = vpop.f32.mrf.mxu0
        %v1031 = vadd.f32 0.0, %v1030
        %v1032 = vpop.f32.mrf.mxu0
        %v1033 = vadd.f32 0.0, %v1032
        %1034 = vmatprep.mubr.f32.mxu0 0.0
        %1035 = vmatmul.mubr.f32.gmra.mxu0 %v918
        %v1036 = vpop.f32.mrf.mxu0
        %v1037 = vadd.f32 0.0, %v1036
        %v1038 = vpop.f32.mrf.mxu0
        %v1039 = vadd.f32 0.0, %v1038
        %1040 = vdwg.mxu0
        %1041 = vmatprep.subr.mxu0 %v914
        %1042 = vmatpush1.msra.mxu0 %v913
        %1043 = vmatprep.subr.mxu0 %v912
        %1044 = vmatpush1.msra.mxu0 %v911
        %1045 = vmatprep.subr.mxu0 %v910
        %1046 = vmatpush1.msra.mxu0 %v909
        %1047 = vmatprep.subr.mxu0 %v908
        %1048 = vmatpush1.msra.mxu0 %v907
        %1049 = vmatprep.subr.mxu0 %v906
        %1050 = vmatpush1.msra.mxu0 %v905
        %1051 = vmatprep.subr.mxu0 %v904
        %1052 = vmatpush1.msra.mxu0 %v903
        %1053 = vmatprep.subr.mxu0 %v902
        %1054 = vmatpush1.msra.mxu0 %v901
        %1055 = vmatprep.subr.mxu0 %v900
        %1056 = vmatpush1.msra.mxu0 %v899
        %1057 = vmatprep.subr.mxu0 %v898
        %1058 = vmatpush1.msra.mxu0 %v897
        %1059 = vmatprep.subr.mxu0 %v896
        %1060 = vmatpush1.msra.mxu0 %v895
        %1061 = vmatprep.subr.mxu0 %v894
        %1062 = vmatpush1.msra.mxu0 %v893
        %1063 = vmatprep.subr.mxu0 %v892
        %1064 = vmatpush1.msra.mxu0 %v891
        %1065 = vmatprep.subr.mxu0 %v890
        %1066 = vmatpush1.msra.mxu0 %v889
        %1067 = vmatprep.subr.mxu0 %v888
        %1068 = vmatpush1.msra.mxu0 %v887
        %1069 = vmatprep.subr.mxu0 %v886
        %1070 = vmatpush1.msra.mxu0 %v885
        %1071 = vmatprep.subr.mxu0 %v884
        %1072 = vmatpush1.msra.mxu0 %v883
        %1073 = vmatprep.subr.mxu0 0.0
        %1074 = vmatpush2.msra.mxu0 0.0
        %1075 = vmatprep.subr.mxu0 0.0
        %1076 = vmatpush2.msra.mxu0 0.0
        %1077 = vmatprep.subr.mxu0 0.0
        %1078 = vmatpush2.msra.mxu0 0.0
        %1079 = vmatprep.subr.mxu0 0.0
        %1080 = vmatpush2.msra.mxu0 0.0
        %1081 = vmatprep.subr.mxu0 0.0
        %1082 = vmatpush2.msra.mxu0 0.0
        %1083 = vmatprep.subr.mxu0 0.0
        %1084 = vmatpush2.msra.mxu0 0.0
        %1085 = vmatprep.subr.mxu0 0.0
        %1086 = vmatpush2.msra.mxu0 0.0
        %1087 = vmatprep.subr.mxu0 0.0
        %1088 = vmatpush2.msra.mxu0 0.0
        %1089 = vmatprep.subr.mxu0 0.0
        %1090 = vmatpush2.msra.mxu0 0.0
        %1091 = vmatprep.subr.mxu0 0.0
        %1092 = vmatpush2.msra.mxu0 0.0
        %1093 = vmatprep.subr.mxu0 0.0
        %1094 = vmatpush2.msra.mxu0 0.0
        %1095 = vmatprep.subr.mxu0 0.0
        %1096 = vmatpush2.msra.mxu0 0.0
        %1097 = vmatprep.subr.mxu0 0.0
        %1098 = vmatpush2.msra.mxu0 0.0
        %1099 = vmatprep.subr.mxu0 0.0
        %1100 = vmatpush2.msra.mxu0 0.0
        %1101 = vmatprep.subr.mxu0 0.0
        %1102 = vmatpush2.msra.mxu0 0.0
        %1103 = vmatprep.subr.mxu0 0.0
        %1104 = vmatpush2.msra.mxu0 0.0
        %1105 = vmatprep.mubr.f32.mxu0 0.0
        %1106 = vmatmul.mubr.f32.gmra.mxu0 %v879
        %v1107 = vpop.f32.mrf.mxu0
        %v1108 = vadd.f32 %v1019, %v1107
        %v1109 = vpop.f32.mrf.mxu0
        %v1110 = vadd.f32 %v1021, %v1109
        %1111 = vmatprep.mubr.f32.mxu0 0.0
        %1112 = vmatmul.mubr.f32.gmra.mxu0 %v880
        %v1113 = vpop.f32.mrf.mxu0
        %v1114 = vadd.f32 %v1025, %v1113
        %v1115 = vpop.f32.mrf.mxu0
        %v1116 = vadd.f32 %v1027, %v1115
        %1117 = vmatprep.mubr.f32.mxu0 0.0
        %1118 = vmatmul.mubr.f32.gmra.mxu0 %v881
        %v1119 = vpop.f32.mrf.mxu0
        %v1120 = vadd.f32 %v1031, %v1119
        %v1121 = vpop.f32.mrf.mxu0
        %v1122 = vadd.f32 %v1033, %v1121
        %1123 = vmatprep.mubr.f32.mxu0 0.0
        %1124 = vmatmul.mubr.f32.gmra.mxu0 %v882
        %v1125 = vpop.f32.mrf.mxu0
        %v1126 = vadd.f32 %v1037, %v1125
        %v1127 = vpop.f32.mrf.mxu0
        %v1128 = vadd.f32 %v1039, %v1127
        %1129 = vdwg.mxu0
        %v1130 = vld [vmem:[#allocation3 + $0x2] sm:$0xff]
        %v1131 = vld [vmem:[#allocation3 + $0xa] sm:$0xff]
        %v1132 = vld [vmem:[#allocation3 + $0x12] sm:$0xff]
        %v1133 = vld [vmem:[#allocation3 + $0x1a] sm:$0xff]
        %s1134 = scalar_lea.vmem [#allocation9], 512
        %v1135 = vld [vmem:[%s1134] sm:$0xff]
        %v1136 = vld [vmem:[%s1134 + $0x8] sm:$0xff]
        %v1137 = vld [vmem:[%s1134 + $0x10] sm:$0xff]
        %v1138 = vld [vmem:[%s1134 + $0x18] sm:$0xff]
        %v1139 = vld [vmem:[%s1134 + $0x20] sm:$0xff]
        %v1140 = vld [vmem:[%s1134 + $0x28] sm:$0xff]
        %v1141 = vld [vmem:[%s1134 + $0x30] sm:$0xff]
        %v1142 = vld [vmem:[%s1134 + $0x38] sm:$0xff]
        %v1143 = vld [vmem:[%s1134 + $0x40] sm:$0xff]
        %v1144 = vld [vmem:[%s1134 + $0x48] sm:$0xff]
        %v1145 = vld [vmem:[%s1134 + $0x50] sm:$0xff]
        %v1146 = vld [vmem:[%s1134 + $0x58] sm:$0xff]
        %v1147 = vld [vmem:[%s1134 + $0x60] sm:$0xff]
        %v1148 = vld [vmem:[%s1134 + $0x68] sm:$0xff]
        %v1149 = vld [vmem:[%s1134 + $0x70] sm:$0xff]
        %v1150 = vld [vmem:[%s1134 + $0x78] sm:$0xff]
        %v1151 = vld [vmem:[%s1134 + $0x80] sm:$0xff]
        %v1152 = vld [vmem:[%s1134 + $0x88] sm:$0xff]
        %v1153 = vld [vmem:[%s1134 + $0x90] sm:$0xff]
        %v1154 = vld [vmem:[%s1134 + $0x98] sm:$0xff]
        %v1155 = vld [vmem:[%s1134 + $0xa0] sm:$0xff]
        %v1156 = vld [vmem:[%s1134 + $0xa8] sm:$0xff]
        %v1157 = vld [vmem:[%s1134 + $0xb0] sm:$0xff]
        %v1158 = vld [vmem:[%s1134 + $0xb8] sm:$0xff]
        %v1159 = vld [vmem:[%s1134 + $0xc0] sm:$0xff]
        %v1160 = vld [vmem:[%s1134 + $0xc8] sm:$0xff]
        %v1161 = vld [vmem:[%s1134 + $0xd0] sm:$0xff]
        %v1162 = vld [vmem:[%s1134 + $0xd8] sm:$0xff]
        %v1163 = vld [vmem:[%s1134 + $0xe0] sm:$0xff]
        %v1164 = vld [vmem:[%s1134 + $0xe8] sm:$0xff]
        %v1165 = vld [vmem:[%s1134 + $0xf0] sm:$0xff]
        %v1166 = vld [vmem:[%s1134 + $0xf8] sm:$0xff]
        %1167 = vmatprep.subr.mxu0 %v1166
        %1168 = vmatpush1.msra.mxu0 %v1165
        %1169 = vmatprep.subr.mxu0 %v1164
        %1170 = vmatpush1.msra.mxu0 %v1163
        %1171 = vmatprep.subr.mxu0 %v1162
        %1172 = vmatpush1.msra.mxu0 %v1161
        %1173 = vmatprep.subr.mxu0 %v1160
        %1174 = vmatpush1.msra.mxu0 %v1159
        %1175 = vmatprep.subr.mxu0 %v1158
        %1176 = vmatpush1.msra.mxu0 %v1157
        %1177 = vmatprep.subr.mxu0 %v1156
        %1178 = vmatpush1.msra.mxu0 %v1155
        %1179 = vmatprep.subr.mxu0 %v1154
        %1180 = vmatpush1.msra.mxu0 %v1153
        %1181 = vmatprep.subr.mxu0 %v1152
        %1182 = vmatpush1.msra.mxu0 %v1151
        %1183 = vmatprep.subr.mxu0 %v1150
        %1184 = vmatpush1.msra.mxu0 %v1149
        %1185 = vmatprep.subr.mxu0 %v1148
        %1186 = vmatpush1.msra.mxu0 %v1147
        %1187 = vmatprep.subr.mxu0 %v1146
        %1188 = vmatpush1.msra.mxu0 %v1145
        %1189 = vmatprep.subr.mxu0 %v1144
        %1190 = vmatpush1.msra.mxu0 %v1143
        %1191 = vmatprep.subr.mxu0 %v1142
        %1192 = vmatpush1.msra.mxu0 %v1141
        %1193 = vmatprep.subr.mxu0 %v1140
        %1194 = vmatpush1.msra.mxu0 %v1139
        %1195 = vmatprep.subr.mxu0 %v1138
        %1196 = vmatpush1.msra.mxu0 %v1137
        %1197 = vmatprep.subr.mxu0 %v1136
        %1198 = vmatpush1.msra.mxu0 %v1135
        %1199 = vmatprep.subr.mxu0 0.0
        %1200 = vmatpush2.msra.mxu0 0.0
        %1201 = vmatprep.subr.mxu0 0.0
        %1202 = vmatpush2.msra.mxu0 0.0
        %1203 = vmatprep.subr.mxu0 0.0
        %1204 = vmatpush2.msra.mxu0 0.0
        %1205 = vmatprep.subr.mxu0 0.0
        %1206 = vmatpush2.msra.mxu0 0.0
        %1207 = vmatprep.subr.mxu0 0.0
        %1208 = vmatpush2.msra.mxu0 0.0
        %1209 = vmatprep.subr.mxu0 0.0
        %1210 = vmatpush2.msra.mxu0 0.0
        %1211 = vmatprep.subr.mxu0 0.0
        %1212 = vmatpush2.msra.mxu0 0.0
        %1213 = vmatprep.subr.mxu0 0.0
        %1214 = vmatpush2.msra.mxu0 0.0
        %1215 = vmatprep.subr.mxu0 0.0
        %1216 = vmatpush2.msra.mxu0 0.0
        %1217 = vmatprep.subr.mxu0 0.0
        %1218 = vmatpush2.msra.mxu0 0.0
        %1219 = vmatprep.subr.mxu0 0.0
        %1220 = vmatpush2.msra.mxu0 0.0
        %1221 = vmatprep.subr.mxu0 0.0
        %1222 = vmatpush2.msra.mxu0 0.0
        %1223 = vmatprep.subr.mxu0 0.0
        %1224 = vmatpush2.msra.mxu0 0.0
        %1225 = vmatprep.subr.mxu0 0.0
        %1226 = vmatpush2.msra.mxu0 0.0
        %1227 = vmatprep.subr.mxu0 0.0
        %1228 = vmatpush2.msra.mxu0 0.0
        %1229 = vmatprep.subr.mxu0 0.0
        %1230 = vmatpush2.msra.mxu0 0.0
        %1231 = vmatprep.mubr.f32.mxu0 0.0
        %1232 = vmatmul.mubr.f32.gmra.mxu0 %v1130
        %v1233 = vpop.f32.mrf.mxu0
        %v1234 = vadd.f32 0.0, %v1233
        %v1235 = vpop.f32.mrf.mxu0
        %v1236 = vadd.f32 0.0, %v1235
        %1237 = vmatprep.mubr.f32.mxu0 0.0
        %1238 = vmatmul.mubr.f32.gmra.mxu0 %v1131
        %v1239 = vpop.f32.mrf.mxu0
        %v1240 = vadd.f32 0.0, %v1239
        %v1241 = vpop.f32.mrf.mxu0
        %v1242 = vadd.f32 0.0, %v1241
        %1243 = vmatprep.mubr.f32.mxu0 0.0
        %1244 = vmatmul.mubr.f32.gmra.mxu0 %v1132
        %v1245 = vpop.f32.mrf.mxu0
        %v1246 = vadd.f32 0.0, %v1245
        %v1247 = vpop.f32.mrf.mxu0
        %v1248 = vadd.f32 0.0, %v1247
        %1249 = vmatprep.mubr.f32.mxu0 0.0
        %1250 = vmatmul.mubr.f32.gmra.mxu0 %v1133
        %v1251 = vpop.f32.mrf.mxu0
        %v1252 = vadd.f32 0.0, %v1251
        %v1253 = vpop.f32.mrf.mxu0
        %v1254 = vadd.f32 0.0, %v1253
        %1255 = vdwg.mxu0
        %v1256 = vadd.f32 %v1108, %v1234
        %v1257 = vadd.f32 %v1110, %v1236
        %v1258 = vadd.f32 %v1114, %v1240
        %v1259 = vadd.f32 %v1116, %v1242
        %v1260 = vadd.f32 %v1120, %v1246
        %v1261 = vadd.f32 %v1122, %v1248
        %v1262 = vadd.f32 %v1126, %v1252
        %v1263 = vadd.f32 %v1128, %v1254
        %v1264 = vld [vmem:[%s6] sm:$0x3]
        %v1266 = vlaneseq
        %v1267 = vshrl.u32 %v1266, 7
        %v1268 = vsub.s32 0, %v1267
        %v1269 = vrot.slane %v1264, %v1268
        %v1270 = vlaneseq
        %v1271 = vshrl.u32 %v1270, 7
        %v1272 = vsub.s32 1, %v1271
        %v1273 = vrot.slane %v1264, %v1272
        %v1276 = vadd.f32 %v1256, %v1269
        %v1277 = vadd.f32 %v1257, %v1273
        %v1278 = vadd.f32 %v1258, %v1269
        %v1279 = vadd.f32 %v1259, %v1273
        %v1280 = vadd.f32 %v1260, %v1269
        %v1281 = vadd.f32 %v1261, %v1273
        %v1282 = vadd.f32 %v1262, %v1269
        %v1283 = vadd.f32 %v1263, %v1273
        %v1284 = vmax.f32 %v1276, 0.0
        %v1285 = vmax.f32 %v1277, 0.0
        %v1286 = vmax.f32 %v1278, 0.0
        %v1287 = vmax.f32 %v1279, 0.0
        %v1288 = vmax.f32 %v1280, 0.0
        %v1289 = vmax.f32 %v1281, 0.0
        %v1290 = vmax.f32 %v1282, 0.0
        %v1291 = vmax.f32 %v1283, 0.0
        %1292 = vst [vmem:[%s315] sm:$0xff] %v1284
        %1293 = vst [vmem:[%s315 + $0x8] sm:$0xff] %v1285
        %1294 = vst [vmem:[%s315 + $0x10] sm:$0xff] %v1286
        %1295 = vst [vmem:[%s315 + $0x18] sm:$0xff] %v1287
        %1296 = vst [vmem:[%s315 + $0x20] sm:$0xff] %v1288
        %1297 = vst [vmem:[%s315 + $0x28] sm:$0xff] %v1289
        %1298 = vst [vmem:[%s315 + $0x30] sm:$0xff] %v1290
        %1299 = vst [vmem:[%s315 + $0x38] sm:$0xff] %v1291
        %s1300 = sand.u32 %s183, 1
        %s1301 = scalar_lea.sflag [#allocation6], %s1300
        %s1302 = sand.u32 %s183, 1
        %s1303 = smul.addr %s1302, 64
        %s1304 = scalar_lea.vmem [#allocation10], %s1303
        // Predicated region
        $region61: #{tpu_custom_call.1} parent=47 // pred_check
          %p1305 = pneg %p193
        $region62: #{tpu_custom_call.1} parent=47 // pred_check_branch
          %1307 = sbr.rel (%p1305) target = $region64
        $region63: #{tpu_custom_call.1} parent=47 // pred_region
          %s1309 = ssub.s32 1024, 1024
          %1310 = vsyncadd %s1301, %s1309
          %s1311 = smul.addr %s23, 8
          %s1312 = smul.addr %s1311, 128
          %s1313 = scalar_lea.hbm %s7, %s1312
          %s1314 = sshll.u32 %s1304, 4
          %s1315 = int_to_ptr.vmem [resolvable:$true] %s1314
          %1320 = dma.vmem_to_hbm [thread:$0]  %s1315, 1024, %s1313, %s1301, 256, 256, 16
        $region64: #{tpu_custom_call.1} parent=47 // pred_fallthru
          _
      $region48: #{tpu_custom_call.1} parent=5 // pred_fallthru
        _
      %p1321 = scmp.le.s32.totalorder 2, %s18
      // Predicated region
      $region65: #{tpu_custom_call.1} parent=5 // pred_check
        %p1322 = pneg %p1321
      $region66: #{tpu_custom_call.1} parent=5 // pred_check_branch
        %1324 = sbr.rel (%p1322) target = $region68
      $region67: #{tpu_custom_call.1} parent=5 // pred_region
        %s1325 = ssub.s32 %s18, 2
        // Predicated region
        $region69: #{tpu_custom_call.1} parent=67 // pred_check
          %p1326 = pneg %p199
        $region70: #{tpu_custom_call.1} parent=67 // pred_check_branch
          %1328 = sbr.rel (%p1326) target = $region72
        $region71: #{tpu_custom_call.1} parent=67 // pred_region
          %s1329 = sand.u32 %s184, 1
          %s1330 = scalar_lea.sflag [#allocation6], %s1329
          %s1331 = sand.u32 %s184, 1
          %s1332 = smul.addr %s1331, 64
          %s1333 = scalar_lea.vmem [#allocation10], %s1332
          %1334 = dma.done %s1330, 1024
        $region72: #{tpu_custom_call.1} parent=67 // pred_fallthru
          _
      $region68: #{tpu_custom_call.1} parent=5 // pred_fallthru
        _
    $region6: #{tpu_custom_call.1} parent=1 // loop_footer
      %s22 = sadd.s32 1, %s18
    $region7: #{tpu_custom_call.1} parent=1 // loop_footer_branch
      %17 = sbr.rel target = $region3
    $region8: #{tpu_custom_call.1} parent=1 // loop_exit
      _
    %1335 = vsyncpa [#allocation5], 1
    %s1336 = scalar_lea.sflag [#allocation5], 1
    %1337 = vsyncpa %s1336, 1
    %1338 = vsyncpa [#allocation8], 1
    %1339 = vsyncpa [#allocation6], 1
    %s1340 = scalar_lea.sflag [#allocation6], 1
    %1341 = vsyncpa %s1340, 1

</llo_original>
